<compile_context>
chip_gen: v6e
topology: v6e:2x2x1
jax: 0.10.0
libtpu: 0.0.40
codegen_flags: <defaults>
</compile_context>

<pallas_src>
import functools
import math

import jax
import jax.numpy as jnp
from jax.experimental import pallas as pl
from jax.experimental.pallas import tpu as pltpu


# ---------------------------------------------------------------------------
# Banded-weight construction (eager, done once per deployment — weights are static).
#   band[dt, dh][v*Cin + i, w*Cout + o] = W[dt, dh, v - w + 1, i, o]   (0 outside taps)
# so one matmul of the (rows, W*Cin) activation slab against band[dt, dh] performs the kw
# taps AND the zero 'same' padding along W for every output column at once.
# ---------------------------------------------------------------------------
def _make_band(w, W):
    kt, kh, kw, cin, cout = w.shape
    pad = (kw - 1) // 2
    d = jnp.arange(kw)
    wo = jnp.arange(W)
    wi = jnp.arange(W)
    # E[d, w_out, w_in] = 1 iff w_in == w_out + d - pad
    E = (wi[None, None, :] == (wo[None, :, None] + d[:, None, None] - pad)).astype(jnp.float32)
    band = jnp.einsum('dwv,thdio->thviwo', E, w.astype(jnp.float32))
    return band.reshape(kt, kh, W * cin, W * cout).astype(jnp.bfloat16)


def _prep_conv(w, b, W, pad_lanes=False):
    """-> (band (3,3,W*Cin,W*Cout) bf16, bias row (1, W*Cout) f32).
    pad_lanes: zero-pad Cout so W*Cout is a multiple of 128 -> lane-dense output stores."""
    w = jnp.asarray(w, jnp.float32)
    b = jnp.asarray(b, jnp.float32)
    cout = int(w.shape[4])
    if pad_lanes:
        unit = 128 // math.gcd(W, 128)
        cpad = ((cout + unit - 1) // unit) * unit
        if cpad != cout:
            w = jnp.pad(w, ((0, 0),) * 4 + ((0, cpad - cout),))
            b = jnp.pad(b, (0, cpad - cout))
    band = _make_band(w, W)
    brow = jnp.tile(b, W)[None, :]
    return band, brow


@functools.lru_cache(maxsize=None)
def _vmem_limit_bytes():
    cap = 64 * 1024 * 1024                       # conservative fallback (v7x per-core VMEM)
    try:
        cap = int(getattr(pltpu.get_tpu_info(), "vmem_capacity_bytes", cap)) or cap
    except Exception:
        pass
    # ~3/4 of physical: ~96 MiB on v5e/v6e (128 MiB), ~48 MiB on v7x (64 MiB).
    return int(min(cap * 3 // 4, 100 * 1024 * 1024))


# ---------------------------------------------------------------------------
# Fused conv-chain kernel.  `plan` is a static tuple of ops over a list of in-kernel
# buffers (buffer 0 = input block):
#   ("conv", src_idx, act_kind, alpha_idx) -> append conv3x3x3(bufs[src]) + bias + act
#   ("add",  i, j)                         -> append bufs[i] + bufs[j]
# All convs are 3x3x3, stride 1, 'same' zero padding (T/H padding via the haloed scratch,
# W padding folded into the banded weight).  Retired buffers are SSA values; the compiler
# handles their liveness.
# ---------------------------------------------------------------------------
def _chain_kernel(*refs, plan, dims, n_conv):
    T, H = dims
    alpha_ref = refs[0]                       # SMEM (n_alphas,) f32
    x_ref = refs[1]                           # (1, T, H, W*Cin0)
    conv_refs = refs[2:2 + 2 * n_conv]        # (band_i, bias_row_i) pairs
    o_ref = refs[2 + 2 * n_conv]              # (1, T, H, W*Cout_last)
    pad_ref = refs[3 + 2 * n_conv]            # VMEM scratch (T+2, H+16, W*Cmax) bf16

    CP = pad_ref.shape[2]
    HP = pad_ref.shape[1]                     # H + 16; interior rows live at [8, 8+H)

    # Zero only the halo: the two T halo planes and two 8-row bands covering the H halo
    # rows (7 and 8+H).  The interior is fully overwritten for every conv.
    zplane = jnp.zeros((1, HP, CP), jnp.bfloat16)
    pad_ref[pl.ds(0, 1), :, :] = zplane
    pad_ref[pl.ds(T + 1, 1), :, :] = zplane
    zband = jnp.zeros((T + 2, 8, CP), jnp.bfloat16)
    pad_ref[:, pl.ds(0, 8), :] = zband
    pad_ref[:, pl.ds(8 + H, 8), :] = zband

    bufs = [x_ref[0].astype(jnp.float32)]     # (T, H, W*Cin0) f32
    ci = 0
    for op in plan:
        if op[0] == "conv":
            _, src, act_kind, a_idx = op
            band_ref = conv_refs[2 * ci]
            brow_ref = conv_refs[2 * ci + 1]
            ci += 1
            kin = band_ref.shape[2]            # W * Cin
            kout = band_ref.shape[3]           # W * Cout

            # Single bf16 downcast per conv; sublane-offset-8 interior -> aligned store.
            pad_ref[pl.ds(1, T), pl.ds(8, H), pl.ds(0, kin)] = bufs[src].astype(jnp.bfloat16)

            # 9 big-K MXU matmuls (K = W*Cin).  kh shift hoisted to the outer loop (3 slab
            # reads, <=2 misaligned); kt taps are leading-dim offsets of the loaded value.
            acc = jnp.zeros((T * H, kout), jnp.float32)
            for dh in range(3):
                sh = pad_ref[:, pl.ds(7 + dh, H), pl.ds(0, kin)]       # (T+2, H, kin) bf16
                for dt in range(3):
                    slab = sh[dt:dt + T].reshape(T * H, kin)
                    acc = acc + jnp.dot(slab, band_ref[dt, dh],
                                        preferred_element_type=jnp.float32)

            acc = acc + brow_ref[...]                                  # (1, W*Cout) bias row
            if act_kind == "prelu":
                a = alpha_ref[a_idx]
                acc = jnp.where(acc >= 0.0, acc, a * acc)
            elif act_kind == "relu":
                acc = jnp.maximum(acc, 0.0)
            bufs.append(acc.reshape(T, H, kout))
        else:  # ("add", i, j)
            _, i, j = op
            bufs.append(bufs[i] + bufs[j])

    o_ref[...] = bufs[-1].reshape(o_ref.shape).astype(o_ref.dtype)


def run_chain(x, convs, plan, alphas, out_dtype=jnp.float32):
    """Run a fused conv chain in ONE pallas_call.
    x: (N, T, H, W, C0); convs: [(band, bias_row), ...] in plan order."""
    N, T, H, W, C0 = x.shape
    n_conv = len(convs)

    # Static channel bookkeeping (sanity-checks plan wiring against band shapes).
    chans = [C0]
    cmax = C0
    ci = 0
    for op in plan:
        if op[0] == "conv":
            band, _ = convs[ci]; ci += 1
            assert band.shape[2] % W == 0 and band.shape[3] % W == 0
            cin, cout = band.shape[2] // W, band.shape[3] // W
            assert cin == chans[op[1]], "plan/band channel mismatch"
            cmax = max(cmax, cin)
            chans.append(cout)
        else:
            assert chans[op[1]] == chans[op[2]]
            chans.append(chans[op[1]])
    cout_last = chans[-1]

    alphas_arr = (jnp.stack([jnp.asarray(a, jnp.float32).reshape(()) for a in alphas])
                  if alphas else jnp.zeros((1,), jnp.float32))
    x2 = x.reshape(N, T, H, W * C0)            # channel-minor, lane-flattened (W, C)

    kernel = functools.partial(_chain_kernel, plan=tuple(plan), dims=(T, H), n_conv=n_conv)

    in_specs = [pl.BlockSpec(memory_space=pltpu.MemorySpace.SMEM),                # alphas
                pl.BlockSpec((1, T, H, W * C0), lambda n: (n, 0, 0, 0))]          # input
    operands = [alphas_arr, x2]
    for band, brow in convs:
        # TODO(synk): pipeline_mode=pl.Buffered(1) would single-buffer these grid-invariant
        # weights and halve their VMEM footprint; left at the default for lowering safety.
        in_specs.append(pl.BlockSpec(band.shape, lambda n: (0, 0, 0, 0)))
        in_specs.append(pl.BlockSpec(brow.shape, lambda n: (0, 0)))
        operands += [band, brow]

    # TODO(synk): for real frame sizes, add an H-tile grid axis (1-row halo, "parallel") and
    # cap the band to a W tile (~128-256 output lanes) so bands + activation blocks fit v7x's
    # 64 MiB VMEM and both TensorCores are used; toy shapes fit a full frame per grid step.
    out = pl.pallas_call(
        kernel,
        out_shape=jax.ShapeDtypeStruct((N, T, H, W * cout_last), out_dtype),
        grid=(N,),
        in_specs=in_specs,
        out_specs=pl.BlockSpec((1, T, H, W * cout_last), lambda n: (n, 0, 0, 0)),
        scratch_shapes=[pltpu.VMEM((T + 2, H + 16, W * cmax), jnp.bfloat16)],
        compiler_params=pltpu.CompilerParams(
            dimension_semantics=("parallel",),
            vmem_limit_bytes=_vmem_limit_bytes()),
    )(*operands)
    return out.reshape(N, T, H, W, cout_last)


# ---------------------------------------------------------------------------
# Plan builders (static, derived from the prepared-param structure at trace time).
# ---------------------------------------------------------------------------
def _down_plan(p):
    plan = [("conv", 0, "prelu", 0)]            # first_block: Conv3d(3->mid) + PReLU
    convs = [p["first"][:2]]
    alphas = [p["first"][2]]
    cur, nxt = 1, 2
    for blk in p["res"]:
        # TODO(synk): ResidualBlock3D_NoBN assumed conv3x3x3 -> ReLU -> conv3x3x3 + identity.
        plan.append(("conv", cur, "relu", -1)); convs.append(blk["c1"]); h1, nxt = nxt, nxt + 1
        plan.append(("conv", h1, "none", -1)); convs.append(blk["c2"]); h2, nxt = nxt, nxt + 1
        plan.append(("add", cur, h2)); cur, nxt = nxt, nxt + 1
    # TODO(synk): ModuleNet3D definition not provided; approximated as Conv3d(mid->3) + resize.
    plan.append(("conv", cur, "none", -1)); convs.append(p["head"])
    return plan, convs, alphas


def _up_core_plan(p):
    plan, convs, alphas = [], [], []
    cur, nxt = 0, 1
    for (bd, rd, ad) in p["dense"]:
        # TODO(synk): D2DTInput internals not provided; approximated as residual Conv3d+PReLU.
        ai = len(alphas); alphas.append(ad)
        plan.append(("conv", cur, "prelu", ai)); convs.append((bd, rd)); c, nxt = nxt, nxt + 1
        plan.append(("add", cur, c)); cur, nxt = nxt, nxt + 1
    bo, ro, ao = p["fuse_out"]; ai = len(alphas); alphas.append(ao)
    plan.append(("conv", cur, "prelu", ai)); convs.append((bo, ro)); fo, nxt = nxt, nxt + 1
    bi, ri, aip = p["fuse_in"]; ai = len(alphas); alphas.append(aip)
    plan.append(("conv", 0, "prelu", ai)); convs.append((bi, ri)); fi, nxt = nxt, nxt + 1
    plan.append(("add", fo, fi))
    return plan, convs, alphas


# ---------------------------------------------------------------------------
# Glue ops (pure JAX): pixel (un)shuffle, resize head, forward wiring.
# ---------------------------------------------------------------------------
def st_pixel_unshuffle(x, s):
    N, T, H, W, C = x.shape
    x = x.reshape(N, T, H // s, s, W // s, s, C)
    x = x.transpose(0, 1, 2, 4, 6, 3, 5)
    return x.reshape(N, T, H // s, W // s, C * s * s)


def st_pixel_shuffle(x, s):
    N, T, H, W, Cs = x.shape
    C = Cs // (s * s)
    x = x.reshape(N, T, H, W, C, s, s)
    x = x.transpose(0, 1, 2, 5, 3, 6, 4)
    return x.reshape(N, T, H * s, W * s, C)


def _resize_head(img, target_size):
    # antialias=False to match torch F.interpolate defaults (align_corners=False).
    N, T, _, _, C = img.shape
    th, tw = target_size
    return jax.image.resize(img, (N, T, th, tw, C), method="bilinear", antialias=False)


def strev_down(p, x, target_size):
    plan, convs, alphas = _down_plan(p)
    img = run_chain(x, convs, plan, alphas)                 # whole down conv chain: 1 pallas_call
    return _resize_head(img[..., :3], target_size)          # head Cout was lane-padded


def strev_up(p, x, target_size):
    band1, brow1, a1 = p["first"]
    feats = run_chain(x, [(band1, brow1)], [("conv", 0, "prelu", 0)], [a1],
                      out_dtype=jnp.bfloat16)
    feats = st_pixel_unshuffle(feats, s=2)                  # UNSTPS: channels*4, spatial/2
    plan, convs, alphas = _up_core_plan(p)
    fused = run_chain(feats, convs, plan, alphas, out_dtype=jnp.bfloat16)
    fused = st_pixel_shuffle(fused, s=2)                    # STPS: channels/4, spatial*2
    img = run_chain(fused, [p["head"]], [("conv", 0, "none", -1)], [])
    return _resize_head(img[..., :3], target_size)           # head Cout was lane-padded


def _rescaler_forward(params, imgs, size, rev=False):
    # imgs: (N, T, H, W, 3) channels-last (NTHWC)
    if not rev:
        out = strev_down(params["down"], imgs, size)
    else:
        out = strev_up(params["up"], imgs, size)
    return jnp.clip(out, 0.0, 1.0)                          # torch.clamp(out, 0, 1)


rescaler_forward = jax.jit(_rescaler_forward, static_argnames=("size", "rev"))


# ---------------------------------------------------------------------------
# Parameter preparation: build banded weights / lane-tiled bias rows ONCE (eagerly),
# keyed on the deployment frame sizes of the down/up paths.
# ---------------------------------------------------------------------------
def prepare_params(raw, down_hw, up_hw):
    Wd = down_hw[1]
    Wu = up_hw[1]
    Wc = Wu // 2                                            # after UNSTPS (s=2)
    d, u = raw["down"], raw["up"]
    down = {
        "first": _prep_conv(d["first"][0], d["first"][1], Wd)
                 + (jnp.asarray(d["first"][2], jnp.float32),),
        "res": [{"c1": _prep_conv(*blk["c1"], Wd), "c2": _prep_conv(*blk["c2"], Wd)}
                for blk in d["res"]],
        "head": _prep_conv(*d["head"], Wd, pad_lanes=True),
    }
    up = {
        "first": _prep_conv(u["first"][0], u["first"][1], Wu)
                 + (jnp.asarray(u["first"][2], jnp.float32),),
        "dense": [_prep_conv(wd, bd, Wc) + (jnp.asarray(ad, jnp.float32),)
                  for (wd, bd, ad) in u["dense"]],
        "fuse_in": _prep_conv(u["fuse_in"][0], u["fuse_in"][1], Wc)
                   + (jnp.asarray(u["fuse_in"][2], jnp.float32),),
        "fuse_out": _prep_conv(u["fuse_out"][0], u["fuse_out"][1], Wc)
                    + (jnp.asarray(u["fuse_out"][2], jnp.float32),),
        "head": _prep_conv(*u["head"], Wu, pad_lanes=True),
    }
    return {"down": down, "up": up}


# ---------------------------------------------------------------------------
# Deterministic synthetic parameter initialization (not a checkpoint load).
# PReLU uses a single shared alpha (nn.PReLU() default, num_parameters=1).
# ---------------------------------------------------------------------------
def _conv_init(key, cin, cout, k=(3, 3, 3)):
    kt, kh, kw = k
    kw_key, kb_key = jax.random.split(key)
    fan_in = cin * kt * kh * kw
    w = jax.random.normal(kw_key, (kt, kh, kw, cin, cout), jnp.float32) / jnp.sqrt(float(fan_in))
    b = 0.01 * jax.random.normal(kb_key, (cout,), jnp.float32)
    return w, b


def init_params(key, mid_down=16, n_res_down=2, in_up=3, mid_up=16, fuse=4, n_res_up=2):
    ki = iter(jax.random.split(key, 32))
    down = {
        "first": _conv_init(next(ki), 3, mid_down) + (jnp.float32(0.25),),
        "res": [{"c1": _conv_init(next(ki), mid_down, mid_down),
                 "c2": _conv_init(next(ki), mid_down, mid_down)} for _ in range(n_res_down)],
        "head": _conv_init(next(ki), mid_down, 3),
    }
    up = {
        "first": _conv_init(next(ki), in_up, mid_up // 4) + (jnp.float32(0.25),),
        "dense": [_conv_init(next(ki), mid_up, mid_up) + (jnp.float32(0.25),)
                  for _ in range(n_res_up)],
        "fuse_in": _conv_init(next(ki), mid_up, fuse * 4) + (jnp.float32(0.25),),
        "fuse_out": _conv_init(next(ki), mid_up, fuse * 4) + (jnp.float32(0.25),),
        "head": _conv_init(next(ki), fuse, 3),
    }
    return {"down": down, "up": up}


if __name__ == "__main__":
    key = jax.random.PRNGKey(0)
    pkey, dkey = jax.random.split(key)
    params_raw = init_params(pkey)
    params = prepare_params(params_raw, down_hw=(16, 16), up_hw=(8, 8))

    # PyTorch-convention input: NCTHW = (batch=1, channels=3, time=4, H=16, W=16)
    imgs_ncthw = jax.random.uniform(dkey, (1, 3, 4, 16, 16), dtype=jnp.float32)
    imgs = jnp.transpose(imgs_ncthw, (0, 2, 3, 4, 1))       # -> NTHWC

    # --- correctness spot-check of the fused conv kernel vs a pure-JAX conv3d ---
    band1, brow1, a1 = params["down"]["first"]
    chk = run_chain(imgs, [(band1, brow1)], [("conv", 0, "prelu", 0)], [a1])
    w1, b1, _ = params_raw["down"]["first"]
    xq = imgs.astype(jnp.bfloat16).astype(jnp.float32)      # kernel feeds the MXU bf16
    wq = w1.astype(jnp.bfloat16).astype(jnp.float32)
    dn = jax.lax.conv_dimension_numbers(xq.shape, wq.shape, ("NDHWC", "DHWIO", "NDHWC"))
    ref = jax.lax.conv_general_dilated(xq, wq, (1, 1, 1), "SAME", dimension_numbers=dn,
                                       precision=jax.lax.Precision.HIGHEST) + b1
    ref = jnp.where(ref >= 0.0, ref, a1 * ref)
    err = float(jnp.max(jnp.abs(chk - ref)))
    assert err < 2e-2, f"conv kernel mismatch vs reference (max abs err {err})"

    # rev=False: downscale to (8, 8)
    down = rescaler_forward(params, imgs, size=(8, 8), rev=False)
    down = jax.block_until_ready(down)
    assert down.shape == (1, 4, 8, 8, 3)
    assert bool(jnp.all(down >= 0.0)) and bool(jnp.all(down <= 1.0))
    assert bool(jnp.all(jnp.isfinite(down)))

    # rev=True: upscale the down result back to (16, 16)
    up = rescaler_forward(params, down, size=(16, 16), rev=True)
    up = jax.block_until_ready(up)
    assert up.shape == (1, 4, 16, 16, 3)
    assert bool(jnp.all(up >= 0.0)) and bool(jnp.all(up <= 1.0))
    assert bool(jnp.all(jnp.isfinite(up)))

    print("KERNEL_OK")
</pallas_src>

<mosaic_0001>
module attributes {stable_mosaic.version = 11 : i64} {
  func.func @_chain_kernel(%arg0: i32, %arg1: memref<1xf32, #tpu.memory_space<smem>>, %arg2: memref<1x4x16x48xf32, #tpu.memory_space<vmem>>, %arg3: memref<3x3x48x256xbf16, #tpu.memory_space<vmem>>, %arg4: memref<1x256xf32, #tpu.memory_space<vmem>>, %arg5: memref<1x4x16x256xf32, #tpu.memory_space<vmem>>, %arg6: memref<6x32x48xbf16, #tpu.memory_space<vmem>>) attributes {dimension_semantics = [#tpu.dimension_semantics<parallel>], iteration_bounds = array<i64: 1>, scalar_prefetch = 0 : i64, scratch_operands = 1 : i64, tpu.core_type = #tpu.core_type<tc>, window_params = [{transform_indices = @transform_0, window_bounds = array<i64: 1>}, {transform_indices = @transform_1, window_bounds = array<i64: 1, 4, 16, 48>}, {pipeline_mode = #tpu.pipeline_mode<synchronous>, transform_indices = @transform_2, window_bounds = array<i64: 3, 3, 48, 256>}, {pipeline_mode = #tpu.pipeline_mode<synchronous>, transform_indices = @transform_3, window_bounds = array<i64: 1, 256>}, {transform_indices = @transform_4, window_bounds = array<i64: 1, 4, 16, 256>}]} {
    %cst = arith.constant 0.000000e+00 : bf16
    %0 = vector.broadcast %cst : bf16 to vector<1x32x48xbf16>
    %c0 = arith.constant 0 : index
    %c0_0 = arith.constant 0 : index
    %c0_1 = arith.constant 0 : index
    %1 = vector.load %arg6[%c0, %c0_0, %c0_1] : memref<6x32x48xbf16, #tpu.memory_space<vmem>>, vector<1x32x48xbf16>
    tpu.vector_store %arg6[%c0, %c0_0, %c0_1], %0 {strides = array<i32>} : memref<6x32x48xbf16, #tpu.memory_space<vmem>>, vector<1x32x48xbf16>,
    %c5 = arith.constant 5 : index
    %c0_2 = arith.constant 0 : index
    %c0_3 = arith.constant 0 : index
    %2 = vector.load %arg6[%c5, %c0_2, %c0_3] : memref<6x32x48xbf16, #tpu.memory_space<vmem>>, vector<1x32x48xbf16>
    tpu.vector_store %arg6[%c5, %c0_2, %c0_3], %0 {strides = array<i32>} : memref<6x32x48xbf16, #tpu.memory_space<vmem>>, vector<1x32x48xbf16>,
    %cst_4 = arith.constant 0.000000e+00 : bf16
    %3 = vector.broadcast %cst_4 : bf16 to vector<6x8x48xbf16>
    %c0_5 = arith.constant 0 : index
    %c0_6 = arith.constant 0 : index
    %c0_7 = arith.constant 0 : index
    %4 = vector.load %arg6[%c0_5, %c0_6, %c0_7] : memref<6x32x48xbf16, #tpu.memory_space<vmem>>, vector<6x8x48xbf16>
    tpu.vector_store %arg6[%c0_5, %c0_6, %c0_7], %3 {strides = array<i32>} : memref<6x32x48xbf16, #tpu.memory_space<vmem>>, vector<6x8x48xbf16>,
    %c0_8 = arith.constant 0 : index
    %c24 = arith.constant 24 : index
    %c0_9 = arith.constant 0 : index
    %5 = vector.load %arg6[%c0_8, %c24, %c0_9] : memref<6x32x48xbf16, #tpu.memory_space<vmem>>, vector<6x8x48xbf16>
    tpu.vector_store %arg6[%c0_8, %c24, %c0_9], %3 {strides = array<i32>} : memref<6x32x48xbf16, #tpu.memory_space<vmem>>, vector<6x8x48xbf16>,
    %c0_10 = arith.constant 0 : index
    %c0_11 = arith.constant 0 : index
    %c0_12 = arith.constant 0 : index
    %c0_13 = arith.constant 0 : index
    %6 = vector.load %arg2[%c0_10, %c0_11, %c0_12, %c0_13] : memref<1x4x16x48xf32, #tpu.memory_space<vmem>>, vector<1x4x16x48xf32>
    %7 = vector.shape_cast %6 : vector<1x4x16x48xf32> to vector<4x16x48xf32>
    %8 = arith.truncf %7 : vector<4x16x48xf32> to vector<4x16x48xbf16>
    %c1 = arith.constant 1 : index
    %c8 = arith.constant 8 : index
    %c0_14 = arith.constant 0 : index
    %9 = vector.load %arg6[%c1, %c8, %c0_14] : memref<6x32x48xbf16, #tpu.memory_space<vmem>>, vector<4x16x48xbf16>
    tpu.vector_store %arg6[%c1, %c8, %c0_14], %8 {strides = array<i32>} : memref<6x32x48xbf16, #tpu.memory_space<vmem>>, vector<4x16x48xbf16>,
    %cst_15 = arith.constant 0.000000e+00 : f32
    %10 = vector.broadcast %cst_15 : f32 to vector<64x256xf32>
    %c0_16 = arith.constant 0 : index
    %c7 = arith.constant 7 : index
    %c0_17 = arith.constant 0 : index
    %11 = vector.load %arg6[%c0_16, %c7, %c0_17] : memref<6x32x48xbf16, #tpu.memory_space<vmem>>, vector<6x16x48xbf16>
    %12 = vector.extract_strided_slice %11 {offsets = [0, 0, 0], sizes = [4, 16, 48], strides = [1, 1, 1]} : vector<6x16x48xbf16> to vector<4x16x48xbf16>
    %13 = vector.shape_cast %12 : vector<4x16x48xbf16> to vector<64x48xbf16>
    %c0_18 = arith.constant 0 : index
    %c0_19 = arith.constant 0 : index
    %c0_20 = arith.constant 0 : index
    %c0_21 = arith.constant 0 : index
    %14 = vector.load %arg3[%c0_18, %c0_19, %c0_20, %c0_21] : memref<3x3x48x256xbf16, #tpu.memory_space<vmem>>, vector<1x1x48x256xbf16>
    %15 = vector.shape_cast %14 : vector<1x1x48x256xbf16> to vector<48x256xbf16>
    %cst_22 = arith.constant dense<0.000000e+00> : vector<64x256xf32>
    %16 = tpu.matmul %13, %15, %cst_22 {dimension_numbers = #tpu.dot_dimension_numbers<[1], [0], [0], [1], [0, 0, 1, 1], [], []>} : vector<64x48xbf16>, vector<48x256xbf16>, vector<64x256xf32> -> vector<64x256xf32>
    %17 = arith.addf %10, %16 : vector<64x256xf32>
    %18 = vector.extract_strided_slice %11 {offsets = [1, 0, 0], sizes = [4, 16, 48], strides = [1, 1, 1]} : vector<6x16x48xbf16> to vector<4x16x48xbf16>
    %19 = vector.shape_cast %18 : vector<4x16x48xbf16> to vector<64x48xbf16>
    %c1_23 = arith.constant 1 : index
    %c0_24 = arith.constant 0 : index
    %c0_25 = arith.constant 0 : index
    %c0_26 = arith.constant 0 : index
    %20 = vector.load %arg3[%c1_23, %c0_24, %c0_25, %c0_26] : memref<3x3x48x256xbf16, #tpu.memory_space<vmem>>, vector<1x1x48x256xbf16>
    %21 = vector.shape_cast %20 : vector<1x1x48x256xbf16> to vector<48x256xbf16>
    %cst_27 = arith.constant dense<0.000000e+00> : vector<64x256xf32>
    %22 = tpu.matmul %19, %21, %cst_27 {dimension_numbers = #tpu.dot_dimension_numbers<[1], [0], [0], [1], [0, 0, 1, 1], [], []>} : vector<64x48xbf16>, vector<48x256xbf16>, vector<64x256xf32> -> vector<64x256xf32>
    %23 = arith.addf %17, %22 : vector<64x256xf32>
    %24 = vector.extract_strided_slice %11 {offsets = [2, 0, 0], sizes = [4, 16, 48], strides = [1, 1, 1]} : vector<6x16x48xbf16> to vector<4x16x48xbf16>
    %25 = vector.shape_cast %24 : vector<4x16x48xbf16> to vector<64x48xbf16>
    %c2 = arith.constant 2 : index
    %c0_28 = arith.constant 0 : index
    %c0_29 = arith.constant 0 : index
    %c0_30 = arith.constant 0 : index
    %26 = vector.load %arg3[%c2, %c0_28, %c0_29, %c0_30] : memref<3x3x48x256xbf16, #tpu.memory_space<vmem>>, vector<1x1x48x256xbf16>
    %27 = vector.shape_cast %26 : vector<1x1x48x256xbf16> to vector<48x256xbf16>
    %cst_31 = arith.constant dense<0.000000e+00> : vector<64x256xf32>
    %28 = tpu.matmul %25, %27, %cst_31 {dimension_numbers = #tpu.dot_dimension_numbers<[1], [0], [0], [1], [0, 0, 1, 1], [], []>} : vector<64x48xbf16>, vector<48x256xbf16>, vector<64x256xf32> -> vector<64x256xf32>
    %29 = arith.addf %23, %28 : vector<64x256xf32>
    %c0_32 = arith.constant 0 : index
    %c8_33 = arith.constant 8 : index
    %c0_34 = arith.constant 0 : index
    %30 = vector.load %arg6[%c0_32, %c8_33, %c0_34] : memref<6x32x48xbf16, #tpu.memory_space<vmem>>, vector<6x16x48xbf16>
    %31 = vector.extract_strided_slice %30 {offsets = [0, 0, 0], sizes = [4, 16, 48], strides = [1, 1, 1]} : vector<6x16x48xbf16> to vector<4x16x48xbf16>
    %32 = vector.shape_cast %31 : vector<4x16x48xbf16> to vector<64x48xbf16>
    %c0_35 = arith.constant 0 : index
    %c1_36 = arith.constant 1 : index
    %c0_37 = arith.constant 0 : index
    %c0_38 = arith.constant 0 : index
    %33 = vector.load %arg3[%c0_35, %c1_36, %c0_37, %c0_38] : memref<3x3x48x256xbf16, #tpu.memory_space<vmem>>, vector<1x1x48x256xbf16>
    %34 = vector.shape_cast %33 : vector<1x1x48x256xbf16> to vector<48x256xbf16>
    %cst_39 = arith.constant dense<0.000000e+00> : vector<64x256xf32>
    %35 = tpu.matmul %32, %34, %cst_39 {dimension_numbers = #tpu.dot_dimension_numbers<[1], [0], [0], [1], [0, 0, 1, 1], [], []>} : vector<64x48xbf16>, vector<48x256xbf16>, vector<64x256xf32> -> vector<64x256xf32>
    %36 = arith.addf %29, %35 : vector<64x256xf32>
    %37 = vector.extract_strided_slice %30 {offsets = [1, 0, 0], sizes = [4, 16, 48], strides = [1, 1, 1]} : vector<6x16x48xbf16> to vector<4x16x48xbf16>
    %38 = vector.shape_cast %37 : vector<4x16x48xbf16> to vector<64x48xbf16>
    %c1_40 = arith.constant 1 : index
    %c1_41 = arith.constant 1 : index
    %c0_42 = arith.constant 0 : index
    %c0_43 = arith.constant 0 : index
    %39 = vector.load %arg3[%c1_40, %c1_41, %c0_42, %c0_43] : memref<3x3x48x256xbf16, #tpu.memory_space<vmem>>, vector<1x1x48x256xbf16>
    %40 = vector.shape_cast %39 : vector<1x1x48x256xbf16> to vector<48x256xbf16>
    %cst_44 = arith.constant dense<0.000000e+00> : vector<64x256xf32>
    %41 = tpu.matmul %38, %40, %cst_44 {dimension_numbers = #tpu.dot_dimension_numbers<[1], [0], [0], [1], [0, 0, 1, 1], [], []>} : vector<64x48xbf16>, vector<48x256xbf16>, vector<64x256xf32> -> vector<64x256xf32>
    %42 = arith.addf %36, %41 : vector<64x256xf32>
    %43 = vector.extract_strided_slice %30 {offsets = [2, 0, 0], sizes = [4, 16, 48], strides = [1, 1, 1]} : vector<6x16x48xbf16> to vector<4x16x48xbf16>
    %44 = vector.shape_cast %43 : vector<4x16x48xbf16> to vector<64x48xbf16>
    %c2_45 = arith.constant 2 : index
    %c1_46 = arith.constant 1 : index
    %c0_47 = arith.constant 0 : index
    %c0_48 = arith.constant 0 : index
    %45 = vector.load %arg3[%c2_45, %c1_46, %c0_47, %c0_48] : memref<3x3x48x256xbf16, #tpu.memory_space<vmem>>, vector<1x1x48x256xbf16>
    %46 = vector.shape_cast %45 : vector<1x1x48x256xbf16> to vector<48x256xbf16>
    %cst_49 = arith.constant dense<0.000000e+00> : vector<64x256xf32>
    %47 = tpu.matmul %44, %46, %cst_49 {dimension_numbers = #tpu.dot_dimension_numbers<[1], [0], [0], [1], [0, 0, 1, 1], [], []>} : vector<64x48xbf16>, vector<48x256xbf16>, vector<64x256xf32> -> vector<64x256xf32>
    %48 = arith.addf %42, %47 : vector<64x256xf32>
    %c0_50 = arith.constant 0 : index
    %c9 = arith.constant 9 : index
    %c0_51 = arith.constant 0 : index
    %49 = vector.load %arg6[%c0_50, %c9, %c0_51] : memref<6x32x48xbf16, #tpu.memory_space<vmem>>, vector<6x16x48xbf16>
    %50 = vector.extract_strided_slice %49 {offsets = [0, 0, 0], sizes = [4, 16, 48], strides = [1, 1, 1]} : vector<6x16x48xbf16> to vector<4x16x48xbf16>
    %51 = vector.shape_cast %50 : vector<4x16x48xbf16> to vector<64x48xbf16>
    %c0_52 = arith.constant 0 : index
    %c2_53 = arith.constant 2 : index
    %c0_54 = arith.constant 0 : index
    %c0_55 = arith.constant 0 : index
    %52 = vector.load %arg3[%c0_52, %c2_53, %c0_54, %c0_55] : memref<3x3x48x256xbf16, #tpu.memory_space<vmem>>, vector<1x1x48x256xbf16>
    %53 = vector.shape_cast %52 : vector<1x1x48x256xbf16> to vector<48x256xbf16>
    %cst_56 = arith.constant dense<0.000000e+00> : vector<64x256xf32>
    %54 = tpu.matmul %51, %53, %cst_56 {dimension_numbers = #tpu.dot_dimension_numbers<[1], [0], [0], [1], [0, 0, 1, 1], [], []>} : vector<64x48xbf16>, vector<48x256xbf16>, vector<64x256xf32> -> vector<64x256xf32>
    %55 = arith.addf %48, %54 : vector<64x256xf32>
    %56 = vector.extract_strided_slice %49 {offsets = [1, 0, 0], sizes = [4, 16, 48], strides = [1, 1, 1]} : vector<6x16x48xbf16> to vector<4x16x48xbf16>
    %57 = vector.shape_cast %56 : vector<4x16x48xbf16> to vector<64x48xbf16>
    %c1_57 = arith.constant 1 : index
    %c2_58 = arith.constant 2 : index
    %c0_59 = arith.constant 0 : index
    %c0_60 = arith.constant 0 : index
    %58 = vector.load %arg3[%c1_57, %c2_58, %c0_59, %c0_60] : memref<3x3x48x256xbf16, #tpu.memory_space<vmem>>, vector<1x1x48x256xbf16>
    %59 = vector.shape_cast %58 : vector<1x1x48x256xbf16> to vector<48x256xbf16>
    %cst_61 = arith.constant dense<0.000000e+00> : vector<64x256xf32>
    %60 = tpu.matmul %57, %59, %cst_61 {dimension_numbers = #tpu.dot_dimension_numbers<[1], [0], [0], [1], [0, 0, 1, 1], [], []>} : vector<64x48xbf16>, vector<48x256xbf16>, vector<64x256xf32> -> vector<64x256xf32>
    %61 = arith.addf %55, %60 : vector<64x256xf32>
    %62 = vector.extract_strided_slice %49 {offsets = [2, 0, 0], sizes = [4, 16, 48], strides = [1, 1, 1]} : vector<6x16x48xbf16> to vector<4x16x48xbf16>
    %63 = vector.shape_cast %62 : vector<4x16x48xbf16> to vector<64x48xbf16>
    %c2_62 = arith.constant 2 : index
    %c2_63 = arith.constant 2 : index
    %c0_64 = arith.constant 0 : index
    %c0_65 = arith.constant 0 : index
    %64 = vector.load %arg3[%c2_62, %c2_63, %c0_64, %c0_65] : memref<3x3x48x256xbf16, #tpu.memory_space<vmem>>, vector<1x1x48x256xbf16>
    %65 = vector.shape_cast %64 : vector<1x1x48x256xbf16> to vector<48x256xbf16>
    %cst_66 = arith.constant dense<0.000000e+00> : vector<64x256xf32>
    %66 = tpu.matmul %63, %65, %cst_66 {dimension_numbers = #tpu.dot_dimension_numbers<[1], [0], [0], [1], [0, 0, 1, 1], [], []>} : vector<64x48xbf16>, vector<48x256xbf16>, vector<64x256xf32> -> vector<64x256xf32>
    %67 = arith.addf %61, %66 : vector<64x256xf32>
    %c0_67 = arith.constant 0 : index
    %c0_68 = arith.constant 0 : index
    %68 = vector.load %arg4[%c0_67, %c0_68] : memref<1x256xf32, #tpu.memory_space<vmem>>, vector<1x256xf32>
    %69 = vector.broadcast %68 : vector<1x256xf32> to vector<64x256xf32>
    %70 = arith.addf %67, %69 : vector<64x256xf32>
    %c0_69 = arith.constant 0 : index
    %71 = memref.load %arg1[%c0_69] : memref<1xf32, #tpu.memory_space<smem>>
    %cst_70 = arith.constant 0.000000e+00 : f32
    %72 = vector.broadcast %cst_70 : f32 to vector<64x256xf32>
    %73 = arith.cmpf oge, %70, %72 : vector<64x256xf32>
    %74 = vector.broadcast %71 : f32 to vector<64x256xf32>
    %75 = arith.mulf %74, %70 : vector<64x256xf32>
    %76 = arith.select %73, %70, %75 : vector<64x256xi1>, vector<64x256xf32>
    %77 = vector.shape_cast %76 : vector<64x256xf32> to vector<4x16x256xf32>
    %78 = vector.shape_cast %77 : vector<4x16x256xf32> to vector<1x4x16x256xf32>
    %c0_71 = arith.constant 0 : index
    %c0_72 = arith.constant 0 : index
    %c0_73 = arith.constant 0 : index
    %c0_74 = arith.constant 0 : index
    %79 = vector.load %arg5[%c0_71, %c0_72, %c0_73, %c0_74] : memref<1x4x16x256xf32, #tpu.memory_space<vmem>>, vector<1x4x16x256xf32>
    tpu.vector_store %arg5[%c0_71, %c0_72, %c0_73, %c0_74], %78 {strides = array<i32>} : memref<1x4x16x256xf32, #tpu.memory_space<vmem>>, vector<1x4x16x256xf32>,
    return
  }
  func.func @transform_0(%arg0: i32) -> i32 {
    %c0_i32 = arith.constant 0 : i32
    %c0_i32_0 = arith.constant 0 : i32
    return %c0_i32 : i32
  }
  func.func @transform_1(%arg0: i32) -> (i32, i32, i32, i32) {
    %c0_i32 = arith.constant 0 : i32
    %c0_i32_0 = arith.constant 0 : i32
    %c0_i32_1 = arith.constant 0 : i32
    %c0_i32_2 = arith.constant 0 : i32
    return %arg0, %c0_i32, %c0_i32_0, %c0_i32_1 : i32, i32, i32, i32
  }
  func.func @transform_2(%arg0: i32) -> (i32, i32, i32, i32) {
    %c0_i32 = arith.constant 0 : i32
    %c0_i32_0 = arith.constant 0 : i32
    %c0_i32_1 = arith.constant 0 : i32
    %c0_i32_2 = arith.constant 0 : i32
    %c0_i32_3 = arith.constant 0 : i32
    return %c0_i32, %c0_i32_0, %c0_i32_1, %c0_i32_2 : i32, i32, i32, i32
  }
  func.func @transform_3(%arg0: i32) -> (i32, i32) {
    %c0_i32 = arith.constant 0 : i32
    %c0_i32_0 = arith.constant 0 : i32
    %c0_i32_1 = arith.constant 0 : i32
    return %c0_i32, %c0_i32_0 : i32, i32
  }
  func.func @transform_4(%arg0: i32) -> (i32, i32, i32, i32) {
    %c0_i32 = arith.constant 0 : i32
    %c0_i32_0 = arith.constant 0 : i32
    %c0_i32_1 = arith.constant 0 : i32
    %c0_i32_2 = arith.constant 0 : i32
    return %arg0, %c0_i32, %c0_i32_0, %c0_i32_1 : i32, i32, i32, i32
  }
}

</mosaic_0001>

<llo_original>
// kernel: tpu_custom_call.1
$region0: #{tpu_custom_call.1}
  #allocation0 [shape = 'u32[]', space=smem, size = 0x4, offset = 0x4, fixed_abs, tag = 'smem constant byte address 0x4 - core index']
  #allocation1 [shape = 'u32[144,128]{1,0:T(1,128)}', space=vmem, size = 0x12000, scoped, tag = 'internal scratch']
  #allocation2 [shape = 'bf16[6,32,48]{2,1,0:T(8,128)(2,1)}', space=vmem, size = 0xc000, scoped, tag = 'scratch operand']
  #allocation3 [shape = 'f32[1]{0:T(128)S(6)}', space=smem, size = 0x200, scoped, tag = 'scoped memory for tpu_custom_call.1']
  %s0 = inlined_call_operand.<no memory space> [shape: f32[1], index: 0, kind: input, shape index: {}]
  %s1 = inlined_call_operand.hbm [shape: f32[1,4,16,48], index: 1, kind: input, shape index: {}]
  %s2 = inlined_call_operand.hbm [shape: bf16[3,3,48,256], index: 2, kind: input, shape index: {}]
  %s3 = inlined_call_operand.vmem [shape: f32[1,256], index: 3, kind: input, shape index: {}]
  %s4 = inlined_call_operand.hbm [shape: f32[1,4,16,256], index: 4, kind: output, shape index: {}]
  %s5 = sld [smem:[#allocation0]]
  $region34: #{tpu_custom_call.1} parent=0
    _
  %s7 = ssub.s32 1, %s5
  %s8 = scalar_select 0, %s7, %s5
  %9 = sst [smem:[#allocation3]] %s0
  $region1: #{tpu_custom_call.1} parent=0
    #allocation4 [shape = 'u8[32768]{0}', space=vmem, size = 0x8000, scoped, tag = 'input window, operand 1, single buffered']
    #allocation5 [shape = 's32[1]{0}', space=sflag, size = 0x4, scoped, tag = 'scoped memory for tpu_custom_call.1']
    #allocation6 [shape = 's32[1]{0}', space=sflag, size = 0x4, scoped, tag = 'scoped memory for tpu_custom_call.1']
    #allocation7 [shape = 'u8[221184]{0}', space=vmem, size = 0x36000, scoped, tag = 'input window, operand 2, single buffered']
    #allocation8 [shape = 's32[1]{0}', space=sflag, size = 0x4, scoped, tag = 'scoped memory for tpu_custom_call.1']
    #allocation9 [shape = 'u8[65536]{0}', space=vmem, size = 0x10000, scoped, tag = 'output window, operand 0, single buffered']
    %10 = vsyncpa [#allocation5], 0
    %11 = vsyncpa [#allocation8], 0
    %12 = vsyncpa [#allocation6], 0
    // Predicated region
    $region2: #{tpu_custom_call.1} parent=1 // pred_check
      _
    $region3: #{tpu_custom_call.1} parent=1 // pred_check_branch
      %14 = sbr.rel (0) target = $region5
    $region4: #{tpu_custom_call.1} parent=1 // pred_region
      _
    $region5: #{tpu_custom_call.1} parent=1 // pred_fallthru
      _
    // Predicated region
    $region6: #{tpu_custom_call.1} parent=1 // pred_check
      _
    $region7: #{tpu_custom_call.1} parent=1 // pred_check_branch
      %16 = sbr.rel (0) target = $region9
    $region8: #{tpu_custom_call.1} parent=1 // pred_region
      %s18 = ssub.s32 1024, 1024
      %19 = vsyncadd [#allocation5], %s18
      %s20 = sshll.u32 [#allocation4], 4
      %s21 = int_to_ptr.vmem [resolvable:$true] %s20
      %26 = dma.hbm_to_vmem [thread:$0]  %s1, 1024, %s21, [#allocation5], 128, 128, 8
    $region9: #{tpu_custom_call.1} parent=1 // pred_fallthru
      _
    // Predicated region
    $region10: #{tpu_custom_call.1} parent=1 // pred_check
      _
    $region11: #{tpu_custom_call.1} parent=1 // pred_check_branch
      %28 = sbr.rel (0) target = $region13
    $region12: #{tpu_custom_call.1} parent=1 // pred_region
      %s30 = ssub.s32 6912, 6912
      %31 = vsyncadd [#allocation8], %s30
      %s32 = sshll.u32 [#allocation7], 4
      %s33 = int_to_ptr.vmem [resolvable:$true] %s32
      %38 = dma.hbm_to_vmem [thread:$0]  %s2, 6912, %s33, [#allocation8], 128, 128, 8
    $region13: #{tpu_custom_call.1} parent=1 // pred_fallthru
      _
    // Predicated region
    $region14: #{tpu_custom_call.1} parent=1 // pred_check
      _
    $region15: #{tpu_custom_call.1} parent=1 // pred_check_branch
      %40 = sbr.rel (0) target = $region17
    $region16: #{tpu_custom_call.1} parent=1 // pred_region
      _
    $region17: #{tpu_custom_call.1} parent=1 // pred_fallthru
      _
    // Predicated region
    $region18: #{tpu_custom_call.1} parent=1 // pred_check
      _
    $region19: #{tpu_custom_call.1} parent=1 // pred_check_branch
      %42 = sbr.rel (0) target = $region21
    $region20: #{tpu_custom_call.1} parent=1 // pred_region
      %43 = dma.done [#allocation5], 1024
    $region21: #{tpu_custom_call.1} parent=1 // pred_fallthru
      _
    // Predicated region
    $region22: #{tpu_custom_call.1} parent=1 // pred_check
      _
    $region23: #{tpu_custom_call.1} parent=1 // pred_check_branch
      %45 = sbr.rel (0) target = $region25
    $region24: #{tpu_custom_call.1} parent=1 // pred_region
      %46 = dma.done [#allocation8], 6912
    $region25: #{tpu_custom_call.1} parent=1 // pred_fallthru
      _
    %vm48 = vcmask 388096
    %49 = vst.msk [vmem:[#allocation2] sm:$0xf] %vm48, 0
    %50 = vst.msk [vmem:[#allocation2 + $0x4] sm:$0xf] %vm48, 0
    %51 = vst.msk [vmem:[#allocation2 + $0x8] sm:$0xf] %vm48, 0
    %52 = vst.msk [vmem:[#allocation2 + $0xc] sm:$0xf] %vm48, 0
    %s53 = scalar_lea.vmem [#allocation2], 80
    %54 = vst.msk [vmem:[%s53] sm:$0xf] %vm48, 0
    %55 = vst.msk [vmem:[%s53 + $0x4] sm:$0xf] %vm48, 0
    %56 = vst.msk [vmem:[%s53 + $0x8] sm:$0xf] %vm48, 0
    %57 = vst.msk [vmem:[%s53 + $0xc] sm:$0xf] %vm48, 0
    %58 = vst.msk [vmem:[#allocation2] sm:$0xf] %vm48, 0
    %59 = vst.msk [vmem:[#allocation2 + $0x10] sm:$0xf] %vm48, 0
    %60 = vst.msk [vmem:[#allocation2 + $0x20] sm:$0xf] %vm48, 0
    %61 = vst.msk [vmem:[#allocation2 + $0x30] sm:$0xf] %vm48, 0
    %62 = vst.msk [vmem:[#allocation2 + $0x40] sm:$0xf] %vm48, 0
    %63 = vst.msk [vmem:[#allocation2 + $0x50] sm:$0xf] %vm48, 0
    %64 = vst.msk [vmem:[#allocation2 + $0xc] sm:$0xf] %vm48, 0
    %65 = vst.msk [vmem:[#allocation2 + $0x1c] sm:$0xf] %vm48, 0
    %66 = vst.msk [vmem:[#allocation2 + $0x2c] sm:$0xf] %vm48, 0
    %67 = vst.msk [vmem:[#allocation2 + $0x3c] sm:$0xf] %vm48, 0
    %68 = vst.msk [vmem:[#allocation2 + $0x4c] sm:$0xf] %vm48, 0
    %69 = vst.msk [vmem:[#allocation2 + $0x5c] sm:$0xf] %vm48, 0
    %v70 = vld [vmem:[#allocation4] sm:$0xff]
    %v71 = vld [vmem:[#allocation4 + $0x8] sm:$0xff]
    %v72 = vld [vmem:[#allocation4 + $0x10] sm:$0xff]
    %v73 = vld [vmem:[#allocation4 + $0x18] sm:$0xff]
    %v74 = vld [vmem:[#allocation4 + $0x20] sm:$0xff]
    %v75 = vld [vmem:[#allocation4 + $0x28] sm:$0xff]
    %v76 = vld [vmem:[#allocation4 + $0x30] sm:$0xff]
    %v77 = vld [vmem:[#allocation4 + $0x38] sm:$0xff]
    %v78 = vpack.c.bf16 %v71, %v70
    %v79 = vpack.c.bf16 %v73, %v72
    %v80 = vpack.c.bf16 %v75, %v74
    %v81 = vpack.c.bf16 %v77, %v76
    %v86 = vunpack.c.l.b16 %v78
    %v87 = vunpack.c.h.b16 %v78
    %v88 = vunpack.c.l.b16 %v79
    %v89 = vunpack.c.h.b16 %v79
    %v90 = vunpack.c.l.b16 %v80
    %v91 = vunpack.c.h.b16 %v80
    %v92 = vunpack.c.l.b16 %v81
    %v93 = vunpack.c.h.b16 %v81
    %v94 = vpack.c.b16 %v86, %v86
    %v95 = vpack.c.b16 %v87, %v87
    %v96 = vpack.c.b16 %v88, %v88
    %v97 = vpack.c.b16 %v89, %v89
    %v98 = vpack.c.b16 %v90, %v90
    %v99 = vpack.c.b16 %v91, %v91
    %v100 = vpack.c.b16 %v92, %v92
    %v101 = vpack.c.b16 %v93, %v93
    %s110 = scalar_lea.vmem [#allocation2], 16
    %111 = vst.msk [vmem:[%s110 + $0x4] sm:$0xf] %vm48, %v94
    %112 = vst.msk [vmem:[%s110 + $0x8] sm:$0xf] %vm48, %v95
    %113 = vst.msk [vmem:[%s110 + $0x14] sm:$0xf] %vm48, %v96
    %114 = vst.msk [vmem:[%s110 + $0x18] sm:$0xf] %vm48, %v97
    %115 = vst.msk [vmem:[%s110 + $0x24] sm:$0xf] %vm48, %v98
    %116 = vst.msk [vmem:[%s110 + $0x28] sm:$0xf] %vm48, %v99
    %117 = vst.msk [vmem:[%s110 + $0x34] sm:$0xf] %vm48, %v100
    %118 = vst.msk [vmem:[%s110 + $0x38] sm:$0xf] %vm48, %v101
    %v119 = vld [vmem:[#allocation2] sm:$0x8]
    %v120 = vld [vmem:[#allocation2 + $0x4] sm:$0xf]
    %v121 = vld [vmem:[#allocation2 + $0x8] sm:$0xf]
    %v122 = vld [vmem:[#allocation2 + $0x10] sm:$0x8]
    %v123 = vld [vmem:[#allocation2 + $0x14] sm:$0xf]
    %v124 = vld [vmem:[#allocation2 + $0x18] sm:$0xf]
    %v125 = vld [vmem:[#allocation2 + $0x20] sm:$0x8]
    %v126 = vld [vmem:[#allocation2 + $0x24] sm:$0xf]
    %v127 = vld [vmem:[#allocation2 + $0x28] sm:$0xf]
    %v128 = vld [vmem:[#allocation2 + $0x30] sm:$0x8]
    %v129 = vld [vmem:[#allocation2 + $0x34] sm:$0xf]
    %v130 = vld [vmem:[#allocation2 + $0x38] sm:$0xf]
    %v131 = vld [vmem:[#allocation2 + $0x40] sm:$0x8]
    %v132 = vld [vmem:[#allocation2 + $0x44] sm:$0xf]
    %v133 = vld [vmem:[#allocation2 + $0x48] sm:$0xf]
    %v134 = vld [vmem:[#allocation2 + $0x50] sm:$0x8]
    %v135 = vld [vmem:[#allocation2 + $0x54] sm:$0xf]
    %v136 = vld [vmem:[#allocation2 + $0x58] sm:$0xf]
    %vm137 = vsmask.f32 256
    %vm138 = vsmask.f32 4368
    %vm139 = vmor %vm137, %vm138
    %v141 = vshrl.u32 %v119, 16
    %v143 = vrot.slane %v141, 7
    %v144 = vrot.slane %v143, 4
    %v146 = vshrl.u32 %v120, 16
    %v148 = vrot.slane %v146, 7
    %v149 = vshll.u32 %v120, 16
    %v151 = vor.u32 %v148, %v149
    %v152 = vsel %vm139, %v144, %v151
    %v153 = vrot.slane %v148, 4
    %v155 = vshrl.u32 %v121, 16
    %v157 = vrot.slane %v155, 7
    %v158 = vshll.u32 %v121, 16
    %v160 = vor.u32 %v157, %v158
    %v161 = vsel %vm139, %v153, %v160
    %v163 = vshrl.u32 %v122, 16
    %v165 = vrot.slane %v163, 7
    %v166 = vrot.slane %v165, 4
    %v168 = vshrl.u32 %v123, 16
    %v170 = vrot.slane %v168, 7
    %v171 = vshll.u32 %v123, 16
    %v173 = vor.u32 %v170, %v171
    %v174 = vsel %vm139, %v166, %v173
    %v175 = vrot.slane %v170, 4
    %v177 = vshrl.u32 %v124, 16
    %v179 = vrot.slane %v177, 7
    %v180 = vshll.u32 %v124, 16
    %v182 = vor.u32 %v179, %v180
    %v183 = vsel %vm139, %v175, %v182
    %v185 = vshrl.u32 %v125, 16
    %v187 = vrot.slane %v185, 7
    %v188 = vrot.slane %v187, 4
    %v190 = vshrl.u32 %v126, 16
    %v192 = vrot.slane %v190, 7
    %v193 = vshll.u32 %v126, 16
    %v195 = vor.u32 %v192, %v193
    %v196 = vsel %vm139, %v188, %v195
    %v197 = vrot.slane %v192, 4
    %v199 = vshrl.u32 %v127, 16
    %v201 = vrot.slane %v199, 7
    %v202 = vshll.u32 %v127, 16
    %v204 = vor.u32 %v201, %v202
    %v205 = vsel %vm139, %v197, %v204
    %v207 = vshrl.u32 %v128, 16
    %v209 = vrot.slane %v207, 7
    %v210 = vrot.slane %v209, 4
    %v212 = vshrl.u32 %v129, 16
    %v214 = vrot.slane %v212, 7
    %v215 = vshll.u32 %v129, 16
    %v217 = vor.u32 %v214, %v215
    %v218 = vsel %vm139, %v210, %v217
    %v219 = vrot.slane %v214, 4
    %v221 = vshrl.u32 %v130, 16
    %v223 = vrot.slane %v221, 7
    %v224 = vshll.u32 %v130, 16
    %v226 = vor.u32 %v223, %v224
    %v227 = vsel %vm139, %v219, %v226
    %v228 = vld [vmem:[#allocation7] sm:$0xff]
    %v229 = vld [vmem:[#allocation7 + $0x8] sm:$0xff]
    %v230 = vld [vmem:[#allocation7 + $0x10] sm:$0xff]
    %v231 = vld [vmem:[#allocation7 + $0x18] sm:$0xff]
    %v232 = vld [vmem:[#allocation7 + $0x20] sm:$0xff]
    %v233 = vld [vmem:[#allocation7 + $0x28] sm:$0xff]
    %v235 = vshrl.u32 %v131, 16
    %v237 = vrot.slane %v235, 7
    %v238 = vrot.slane %v237, 4
    %v240 = vshrl.u32 %v132, 16
    %v242 = vrot.slane %v240, 7
    %v243 = vshll.u32 %v132, 16
    %v245 = vor.u32 %v242, %v243
    %v246 = vsel %vm139, %v238, %v245
    %v247 = vrot.slane %v242, 4
    %v249 = vshrl.u32 %v133, 16
    %v251 = vrot.slane %v249, 7
    %v252 = vshll.u32 %v133, 16
    %v254 = vor.u32 %v251, %v252
    %v255 = vsel %vm139, %v247, %v254
    %s256 = scalar_lea.vmem [#allocation7], 144
    %v257 = vld [vmem:[%s256] sm:$0xff]
    %v258 = vld [vmem:[%s256 + $0x8] sm:$0xff]
    %v259 = vld [vmem:[%s256 + $0x10] sm:$0xff]
    %v260 = vld [vmem:[%s256 + $0x18] sm:$0xff]
    %v261 = vld [vmem:[%s256 + $0x20] sm:$0xff]
    %v262 = vld [vmem:[%s256 + $0x28] sm:$0xff]
    %v263 = vunpack.c.l.b16 %v174
    %v264 = vunpack.c.l.b16 %v183
    %v265 = vunpack.c.l.b16 %v196
    %v266 = vunpack.c.l.b16 %v205
    %v267 = vunpack.c.l.b16 %v218
    %v268 = vunpack.c.l.b16 %v227
    %v269 = vunpack.c.l.b16 %v246
    %v270 = vunpack.c.l.b16 %v255
    %v271 = vpack.c.b16 %v264, %v263
    %v272 = vpack.c.b16 %v266, %v265
    %v273 = vpack.c.b16 %v268, %v267
    %v274 = vpack.c.b16 %v270, %v269
    %v281 = vunpack.c.l.b16 %v257
    %v282 = vunpack.c.h.b16 %v257
    %v283 = vunpack.c.l.b16 %v258
    %v284 = vunpack.c.h.b16 %v258
    %v285 = vunpack.c.l.b16 %v259
    %v286 = vunpack.c.h.b16 %v259
    %v287 = vunpack.c.l.b16 %v260
    %v288 = vunpack.c.h.b16 %v260
    %v289 = vunpack.c.l.b16 %v261
    %v290 = vunpack.c.h.b16 %v261
    %v291 = vunpack.c.l.b16 %v262
    %v292 = vunpack.c.h.b16 %v262
    %v293 = vpack.c.b16 %v283, %v281
    %v294 = vpack.c.b16 %v284, %v282
    %v295 = vpack.c.b16 %v287, %v285
    %v296 = vpack.c.b16 %v288, %v286
    %v297 = vpack.c.b16 %v291, %v289
    %v298 = vpack.c.b16 %v292, %v290
    %vm305 = vcmask 392192
    %v307 = vsel %vm305, %v271, 0
    %v310 = vsel %vm305, %v272, 0
    %v313 = vsel %vm305, %v273, 0
    %v316 = vsel %vm305, %v274, 0
    %318 = vmatprep.subr.bf16.mxu0 0
    %319 = vmatpush1.bf16.msra.mxu0 0
    %320 = vmatprep.subr.bf16.mxu0 0
    %321 = vmatpush1.bf16.msra.mxu0 0
    %322 = vmatprep.subr.bf16.mxu0 0
    %323 = vmatpush1.bf16.msra.mxu0 0
    %324 = vmatprep.subr.bf16.mxu0 0
    %325 = vmatpush1.bf16.msra.mxu0 0
    %326 = vmatprep.subr.bf16.mxu0 0
    %327 = vmatpush1.bf16.msra.mxu0 0
    %328 = vmatprep.subr.bf16.mxu0 %v298
    %329 = vmatpush1.bf16.msra.mxu0 %v297
    %330 = vmatprep.subr.bf16.mxu0 %v296
    %331 = vmatpush1.bf16.msra.mxu0 %v295
    %332 = vmatprep.subr.bf16.mxu0 %v294
    %333 = vmatpush1.bf16.msra.mxu0 %v293
    %334 = vmatprep.subr.bf16.mxu0 0
    %335 = vmatpush2.bf16.msra.mxu0 0
    %336 = vmatprep.subr.bf16.mxu0 0
    %337 = vmatpush2.bf16.msra.mxu0 0
    %338 = vmatprep.subr.bf16.mxu0 0
    %339 = vmatpush2.bf16.msra.mxu0 0
    %340 = vmatprep.subr.bf16.mxu0 0
    %341 = vmatpush2.bf16.msra.mxu0 0
    %342 = vmatprep.subr.bf16.mxu0 0
    %343 = vmatpush2.bf16.msra.mxu0 0
    %344 = vmatprep.subr.bf16.mxu0 0
    %345 = vmatpush2.bf16.msra.mxu0 0
    %346 = vmatprep.subr.bf16.mxu0 0
    %347 = vmatpush2.bf16.msra.mxu0 0
    %348 = vmatprep.subr.bf16.mxu0 0
    %349 = vmatpush2.bf16.msra.mxu0 0
    %350 = vmatprep.mubr.bf16.mxu0 0
    %351 = vmatmul.mubr.bf16.gmra.mxu0 %v307
    %v352 = vpop.f32.mrf.mxu0
    %v353 = vadd.f32 0.0, %v352
    %v354 = vpop.f32.mrf.mxu0
    %v355 = vadd.f32 0.0, %v354
    %v356 = vpop.f32.mrf.mxu0
    %v357 = vadd.f32 0.0, %v356
    %v358 = vpop.f32.mrf.mxu0
    %v359 = vadd.f32 0.0, %v358
    %360 = vmatprep.mubr.bf16.mxu0 0
    %361 = vmatmul.mubr.bf16.gmra.mxu0 %v310
    %v362 = vpop.f32.mrf.mxu0
    %v363 = vadd.f32 0.0, %v362
    %v364 = vpop.f32.mrf.mxu0
    %v365 = vadd.f32 0.0, %v364
    %v366 = vpop.f32.mrf.mxu0
    %v367 = vadd.f32 0.0, %v366
    %v368 = vpop.f32.mrf.mxu0
    %v369 = vadd.f32 0.0, %v368
    %370 = vmatprep.mubr.bf16.mxu0 0
    %371 = vmatmul.mubr.bf16.gmra.mxu0 %v313
    %v372 = vpop.f32.mrf.mxu0
    %v373 = vadd.f32 0.0, %v372
    %v374 = vpop.f32.mrf.mxu0
    %v375 = vadd.f32 0.0, %v374
    %v376 = vpop.f32.mrf.mxu0
    %v377 = vadd.f32 0.0, %v376
    %v378 = vpop.f32.mrf.mxu0
    %v379 = vadd.f32 0.0, %v378
    %380 = vmatprep.mubr.bf16.mxu0 0
    %381 = vmatmul.mubr.bf16.gmra.mxu0 %v316
    %v382 = vpop.f32.mrf.mxu0
    %v383 = vadd.f32 0.0, %v382
    %v384 = vpop.f32.mrf.mxu0
    %v385 = vadd.f32 0.0, %v384
    %v386 = vpop.f32.mrf.mxu0
    %v387 = vadd.f32 0.0, %v386
    %v388 = vpop.f32.mrf.mxu0
    %v389 = vadd.f32 0.0, %v388
    %390 = vdwg.mxu0
    %v391 = vunpack.c.l.b16 %v152
    %v392 = vunpack.c.l.b16 %v161
    %v393 = vpack.c.b16 %v392, %v391
    %v400 = vunpack.c.l.b16 %v228
    %v401 = vunpack.c.h.b16 %v228
    %v402 = vunpack.c.l.b16 %v229
    %v403 = vunpack.c.h.b16 %v229
    %v404 = vunpack.c.l.b16 %v230
    %v405 = vunpack.c.h.b16 %v230
    %v406 = vunpack.c.l.b16 %v231
    %v407 = vunpack.c.h.b16 %v231
    %v408 = vunpack.c.l.b16 %v232
    %v409 = vunpack.c.h.b16 %v232
    %v410 = vunpack.c.l.b16 %v233
    %v411 = vunpack.c.h.b16 %v233
    %v412 = vpack.c.b16 %v402, %v400
    %v413 = vpack.c.b16 %v403, %v401
    %v414 = vpack.c.b16 %v406, %v404
    %v415 = vpack.c.b16 %v407, %v405
    %v416 = vpack.c.b16 %v410, %v408
    %v417 = vpack.c.b16 %v411, %v409
    %v425 = vsel %vm305, %v393, 0
    %427 = vmatprep.subr.bf16.mxu0 0
    %428 = vmatpush1.bf16.msra.mxu0 0
    %429 = vmatprep.subr.bf16.mxu0 0
    %430 = vmatpush1.bf16.msra.mxu0 0
    %431 = vmatprep.subr.bf16.mxu0 0
    %432 = vmatpush1.bf16.msra.mxu0 0
    %433 = vmatprep.subr.bf16.mxu0 0
    %434 = vmatpush1.bf16.msra.mxu0 0
    %435 = vmatprep.subr.bf16.mxu0 0
    %436 = vmatpush1.bf16.msra.mxu0 0
    %437 = vmatprep.subr.bf16.mxu0 %v417
    %438 = vmatpush1.bf16.msra.mxu0 %v416
    %439 = vmatprep.subr.bf16.mxu0 %v415
    %440 = vmatpush1.bf16.msra.mxu0 %v414
    %441 = vmatprep.subr.bf16.mxu0 %v413
    %442 = vmatpush1.bf16.msra.mxu0 %v412
    %443 = vmatprep.subr.bf16.mxu0 0
    %444 = vmatpush2.bf16.msra.mxu0 0
    %445 = vmatprep.subr.bf16.mxu0 0
    %446 = vmatpush2.bf16.msra.mxu0 0
    %447 = vmatprep.subr.bf16.mxu0 0
    %448 = vmatpush2.bf16.msra.mxu0 0
    %449 = vmatprep.subr.bf16.mxu0 0
    %450 = vmatpush2.bf16.msra.mxu0 0
    %451 = vmatprep.subr.bf16.mxu0 0
    %452 = vmatpush2.bf16.msra.mxu0 0
    %453 = vmatprep.subr.bf16.mxu0 0
    %454 = vmatpush2.bf16.msra.mxu0 0
    %455 = vmatprep.subr.bf16.mxu0 0
    %456 = vmatpush2.bf16.msra.mxu0 0
    %457 = vmatprep.subr.bf16.mxu0 0
    %458 = vmatpush2.bf16.msra.mxu0 0
    %459 = vmatprep.mubr.bf16.mxu0 0
    %460 = vmatmul.mubr.bf16.gmra.mxu0 %v425
    %v461 = vpop.f32.mrf.mxu0
    %v462 = vadd.f32 %v353, %v461
    %v463 = vpop.f32.mrf.mxu0
    %v464 = vadd.f32 %v355, %v463
    %v465 = vpop.f32.mrf.mxu0
    %v466 = vadd.f32 %v357, %v465
    %v467 = vpop.f32.mrf.mxu0
    %v468 = vadd.f32 %v359, %v467
    %469 = vmatprep.mubr.bf16.mxu0 0
    %470 = vmatmul.mubr.bf16.gmra.mxu0 %v307
    %v471 = vpop.f32.mrf.mxu0
    %v472 = vadd.f32 %v363, %v471
    %v473 = vpop.f32.mrf.mxu0
    %v474 = vadd.f32 %v365, %v473
    %v475 = vpop.f32.mrf.mxu0
    %v476 = vadd.f32 %v367, %v475
    %v477 = vpop.f32.mrf.mxu0
    %v478 = vadd.f32 %v369, %v477
    %479 = vmatprep.mubr.bf16.mxu0 0
    %480 = vmatmul.mubr.bf16.gmra.mxu0 %v310
    %v481 = vpop.f32.mrf.mxu0
    %v482 = vadd.f32 %v373, %v481
    %v483 = vpop.f32.mrf.mxu0
    %v484 = vadd.f32 %v375, %v483
    %v485 = vpop.f32.mrf.mxu0
    %v486 = vadd.f32 %v377, %v485
    %v487 = vpop.f32.mrf.mxu0
    %v488 = vadd.f32 %v379, %v487
    %489 = vmatprep.mubr.bf16.mxu0 0
    %490 = vmatmul.mubr.bf16.gmra.mxu0 %v313
    %v491 = vpop.f32.mrf.mxu0
    %v492 = vadd.f32 %v383, %v491
    %v493 = vpop.f32.mrf.mxu0
    %v494 = vadd.f32 %v385, %v493
    %v495 = vpop.f32.mrf.mxu0
    %v496 = vadd.f32 %v387, %v495
    %v497 = vpop.f32.mrf.mxu0
    %v498 = vadd.f32 %v389, %v497
    %499 = vdwg.mxu0
    %v501 = vshrl.u32 %v134, 16
    %v503 = vrot.slane %v501, 7
    %v504 = vrot.slane %v503, 4
    %v506 = vshrl.u32 %v135, 16
    %v508 = vrot.slane %v506, 7
    %v509 = vshll.u32 %v135, 16
    %v511 = vor.u32 %v508, %v509
    %v512 = vsel %vm139, %v504, %v511
    %v513 = vrot.slane %v508, 4
    %v515 = vshrl.u32 %v136, 16
    %v517 = vrot.slane %v515, 7
    %v518 = vshll.u32 %v136, 16
    %v520 = vor.u32 %v517, %v518
    %v521 = vsel %vm139, %v513, %v520
    %s522 = scalar_lea.vmem [#allocation7], 288
    %v523 = vld [vmem:[%s522] sm:$0xff]
    %v524 = vld [vmem:[%s522 + $0x8] sm:$0xff]
    %v525 = vld [vmem:[%s522 + $0x10] sm:$0xff]
    %v526 = vld [vmem:[%s522 + $0x18] sm:$0xff]
    %v527 = vld [vmem:[%s522 + $0x20] sm:$0xff]
    %v528 = vld [vmem:[%s522 + $0x28] sm:$0xff]
    %v529 = vunpack.c.l.b16 %v512
    %v530 = vunpack.c.l.b16 %v521
    %v531 = vpack.c.b16 %v530, %v529
    %v538 = vunpack.c.l.b16 %v523
    %v539 = vunpack.c.h.b16 %v523
    %v540 = vunpack.c.l.b16 %v524
    %v541 = vunpack.c.h.b16 %v524
    %v542 = vunpack.c.l.b16 %v525
    %v543 = vunpack.c.h.b16 %v525
    %v544 = vunpack.c.l.b16 %v526
    %v545 = vunpack.c.h.b16 %v526
    %v546 = vunpack.c.l.b16 %v527
    %v547 = vunpack.c.h.b16 %v527
    %v548 = vunpack.c.l.b16 %v528
    %v549 = vunpack.c.h.b16 %v528
    %v550 = vpack.c.b16 %v540, %v538
    %v551 = vpack.c.b16 %v541, %v539
    %v552 = vpack.c.b16 %v544, %v542
    %v553 = vpack.c.b16 %v545, %v543
    %v554 = vpack.c.b16 %v548, %v546
    %v555 = vpack.c.b16 %v549, %v547
    %v563 = vsel %vm305, %v531, 0
    %565 = vmatprep.subr.bf16.mxu0 0
    %566 = vmatpush1.bf16.msra.mxu0 0
    %567 = vmatprep.subr.bf16.mxu0 0
    %568 = vmatpush1.bf16.msra.mxu0 0
    %569 = vmatprep.subr.bf16.mxu0 0
    %570 = vmatpush1.bf16.msra.mxu0 0
    %571 = vmatprep.subr.bf16.mxu0 0
    %572 = vmatpush1.bf16.msra.mxu0 0
    %573 = vmatprep.subr.bf16.mxu0 0
    %574 = vmatpush1.bf16.msra.mxu0 0
    %575 = vmatprep.subr.bf16.mxu0 %v555
    %576 = vmatpush1.bf16.msra.mxu0 %v554
    %577 = vmatprep.subr.bf16.mxu0 %v553
    %578 = vmatpush1.bf16.msra.mxu0 %v552
    %579 = vmatprep.subr.bf16.mxu0 %v551
    %580 = vmatpush1.bf16.msra.mxu0 %v550
    %581 = vmatprep.subr.bf16.mxu0 0
    %582 = vmatpush2.bf16.msra.mxu0 0
    %583 = vmatprep.subr.bf16.mxu0 0
    %584 = vmatpush2.bf16.msra.mxu0 0
    %585 = vmatprep.subr.bf16.mxu0 0
    %586 = vmatpush2.bf16.msra.mxu0 0
    %587 = vmatprep.subr.bf16.mxu0 0
    %588 = vmatpush2.bf16.msra.mxu0 0
    %589 = vmatprep.subr.bf16.mxu0 0
    %590 = vmatpush2.bf16.msra.mxu0 0
    %591 = vmatprep.subr.bf16.mxu0 0
    %592 = vmatpush2.bf16.msra.mxu0 0
    %593 = vmatprep.subr.bf16.mxu0 0
    %594 = vmatpush2.bf16.msra.mxu0 0
    %595 = vmatprep.subr.bf16.mxu0 0
    %596 = vmatpush2.bf16.msra.mxu0 0
    %597 = vmatprep.mubr.bf16.mxu0 0
    %598 = vmatmul.mubr.bf16.gmra.mxu0 %v310
    %v599 = vpop.f32.mrf.mxu0
    %v600 = vadd.f32 0.0, %v599
    %v601 = vpop.f32.mrf.mxu0
    %v602 = vadd.f32 0.0, %v601
    %v603 = vpop.f32.mrf.mxu0
    %v604 = vadd.f32 0.0, %v603
    %v605 = vpop.f32.mrf.mxu0
    %v606 = vadd.f32 0.0, %v605
    %607 = vmatprep.mubr.bf16.mxu0 0
    %608 = vmatmul.mubr.bf16.gmra.mxu0 %v313
    %v609 = vpop.f32.mrf.mxu0
    %v610 = vadd.f32 0.0, %v609
    %v611 = vpop.f32.mrf.mxu0
    %v612 = vadd.f32 0.0, %v611
    %v613 = vpop.f32.mrf.mxu0
    %v614 = vadd.f32 0.0, %v613
    %v615 = vpop.f32.mrf.mxu0
    %v616 = vadd.f32 0.0, %v615
    %617 = vmatprep.mubr.bf16.mxu0 0
    %618 = vmatmul.mubr.bf16.gmra.mxu0 %v316
    %v619 = vpop.f32.mrf.mxu0
    %v620 = vadd.f32 0.0, %v619
    %v621 = vpop.f32.mrf.mxu0
    %v622 = vadd.f32 0.0, %v621
    %v623 = vpop.f32.mrf.mxu0
    %v624 = vadd.f32 0.0, %v623
    %v625 = vpop.f32.mrf.mxu0
    %v626 = vadd.f32 0.0, %v625
    %627 = vmatprep.mubr.bf16.mxu0 0
    %628 = vmatmul.mubr.bf16.gmra.mxu0 %v563
    %v629 = vpop.f32.mrf.mxu0
    %v630 = vadd.f32 0.0, %v629
    %v631 = vpop.f32.mrf.mxu0
    %v632 = vadd.f32 0.0, %v631
    %v633 = vpop.f32.mrf.mxu0
    %v634 = vadd.f32 0.0, %v633
    %v635 = vpop.f32.mrf.mxu0
    %v636 = vadd.f32 0.0, %v635
    %637 = vdwg.mxu0
    %v638 = vadd.f32 %v462, %v600
    %v639 = vadd.f32 %v464, %v602
    %v640 = vadd.f32 %v466, %v604
    %v641 = vadd.f32 %v468, %v606
    %v642 = vadd.f32 %v472, %v610
    %v643 = vadd.f32 %v474, %v612
    %v644 = vadd.f32 %v476, %v614
    %v645 = vadd.f32 %v478, %v616
    %v646 = vadd.f32 %v482, %v620
    %v647 = vadd.f32 %v484, %v622
    %v648 = vadd.f32 %v486, %v624
    %v649 = vadd.f32 %v488, %v626
    %v650 = vadd.f32 %v492, %v630
    %v651 = vadd.f32 %v494, %v632
    %v652 = vadd.f32 %v496, %v634
    %v653 = vadd.f32 %v498, %v636
    %s654 = scalar_lea.vmem [#allocation7], 48
    %v655 = vld [vmem:[%s654] sm:$0xff]
    %v656 = vld [vmem:[%s654 + $0x8] sm:$0xff]
    %v657 = vld [vmem:[%s654 + $0x10] sm:$0xff]
    %v658 = vld [vmem:[%s654 + $0x18] sm:$0xff]
    %v659 = vld [vmem:[%s654 + $0x20] sm:$0xff]
    %v660 = vld [vmem:[%s654 + $0x28] sm:$0xff]
    %v669 = vunpack.c.l.b16 %v120
    %v670 = vunpack.c.l.b16 %v121
    %v671 = vunpack.c.l.b16 %v123
    %v672 = vunpack.c.l.b16 %v124
    %v673 = vunpack.c.l.b16 %v126
    %v674 = vunpack.c.l.b16 %v127
    %v675 = vunpack.c.l.b16 %v129
    %v676 = vunpack.c.l.b16 %v130
    %v677 = vpack.c.b16 %v670, %v669
    %v678 = vpack.c.b16 %v672, %v671
    %v679 = vpack.c.b16 %v674, %v673
    %v680 = vpack.c.b16 %v676, %v675
    %v687 = vunpack.c.l.b16 %v655
    %v688 = vunpack.c.h.b16 %v655
    %v689 = vunpack.c.l.b16 %v656
    %v690 = vunpack.c.h.b16 %v656
    %v691 = vunpack.c.l.b16 %v657
    %v692 = vunpack.c.h.b16 %v657
    %v693 = vunpack.c.l.b16 %v658
    %v694 = vunpack.c.h.b16 %v658
    %v695 = vunpack.c.l.b16 %v659
    %v696 = vunpack.c.h.b16 %v659
    %v697 = vunpack.c.l.b16 %v660
    %v698 = vunpack.c.h.b16 %v660
    %v699 = vpack.c.b16 %v689, %v687
    %v700 = vpack.c.b16 %v690, %v688
    %v701 = vpack.c.b16 %v693, %v691
    %v702 = vpack.c.b16 %v694, %v692
    %v703 = vpack.c.b16 %v697, %v695
    %v704 = vpack.c.b16 %v698, %v696
    %v712 = vsel %vm305, %v677, 0
    %v715 = vsel %vm305, %v678, 0
    %v718 = vsel %vm305, %v679, 0
    %v721 = vsel %vm305, %v680, 0
    %723 = vmatprep.subr.bf16.mxu0 0
    %724 = vmatpush1.bf16.msra.mxu0 0
    %725 = vmatprep.subr.bf16.mxu0 0
    %726 = vmatpush1.bf16.msra.mxu0 0
    %727 = vmatprep.subr.bf16.mxu0 0
    %728 = vmatpush1.bf16.msra.mxu0 0
    %729 = vmatprep.subr.bf16.mxu0 0
    %730 = vmatpush1.bf16.msra.mxu0 0
    %731 = vmatprep.subr.bf16.mxu0 0
    %732 = vmatpush1.bf16.msra.mxu0 0
    %733 = vmatprep.subr.bf16.mxu0 %v704
    %734 = vmatpush1.bf16.msra.mxu0 %v703
    %735 = vmatprep.subr.bf16.mxu0 %v702
    %736 = vmatpush1.bf16.msra.mxu0 %v701
    %737 = vmatprep.subr.bf16.mxu0 %v700
    %738 = vmatpush1.bf16.msra.mxu0 %v699
    %739 = vmatprep.subr.bf16.mxu0 0
    %740 = vmatpush2.bf16.msra.mxu0 0
    %741 = vmatprep.subr.bf16.mxu0 0
    %742 = vmatpush2.bf16.msra.mxu0 0
    %743 = vmatprep.subr.bf16.mxu0 0
    %744 = vmatpush2.bf16.msra.mxu0 0
    %745 = vmatprep.subr.bf16.mxu0 0
    %746 = vmatpush2.bf16.msra.mxu0 0
    %747 = vmatprep.subr.bf16.mxu0 0
    %748 = vmatpush2.bf16.msra.mxu0 0
    %749 = vmatprep.subr.bf16.mxu0 0
    %750 = vmatpush2.bf16.msra.mxu0 0
    %751 = vmatprep.subr.bf16.mxu0 0
    %752 = vmatpush2.bf16.msra.mxu0 0
    %753 = vmatprep.subr.bf16.mxu0 0
    %754 = vmatpush2.bf16.msra.mxu0 0
    %755 = vmatprep.mubr.bf16.mxu0 0
    %756 = vmatmul.mubr.bf16.gmra.mxu0 %v712
    %v757 = vpop.f32.mrf.mxu0
    %v758 = vadd.f32 0.0, %v757
    %v759 = vpop.f32.mrf.mxu0
    %v760 = vadd.f32 0.0, %v759
    %v761 = vpop.f32.mrf.mxu0
    %v762 = vadd.f32 0.0, %v761
    %v763 = vpop.f32.mrf.mxu0
    %v764 = vadd.f32 0.0, %v763
    %765 = vmatprep.mubr.bf16.mxu0 0
    %766 = vmatmul.mubr.bf16.gmra.mxu0 %v715
    %v767 = vpop.f32.mrf.mxu0
    %v768 = vadd.f32 0.0, %v767
    %v769 = vpop.f32.mrf.mxu0
    %v770 = vadd.f32 0.0, %v769
    %v771 = vpop.f32.mrf.mxu0
    %v772 = vadd.f32 0.0, %v771
    %v773 = vpop.f32.mrf.mxu0
    %v774 = vadd.f32 0.0, %v773
    %775 = vmatprep.mubr.bf16.mxu0 0
    %776 = vmatmul.mubr.bf16.gmra.mxu0 %v718
    %v777 = vpop.f32.mrf.mxu0
    %v778 = vadd.f32 0.0, %v777
    %v779 = vpop.f32.mrf.mxu0
    %v780 = vadd.f32 0.0, %v779
    %v781 = vpop.f32.mrf.mxu0
    %v782 = vadd.f32 0.0, %v781
    %v783 = vpop.f32.mrf.mxu0
    %v784 = vadd.f32 0.0, %v783
    %785 = vmatprep.mubr.bf16.mxu0 0
    %786 = vmatmul.mubr.bf16.gmra.mxu0 %v721
    %v787 = vpop.f32.mrf.mxu0
    %v788 = vadd.f32 0.0, %v787
    %v789 = vpop.f32.mrf.mxu0
    %v790 = vadd.f32 0.0, %v789
    %v791 = vpop.f32.mrf.mxu0
    %v792 = vadd.f32 0.0, %v791
    %v793 = vpop.f32.mrf.mxu0
    %v794 = vadd.f32 0.0, %v793
    %795 = vdwg.mxu0
    %v796 = vadd.f32 %v638, %v758
    %v797 = vadd.f32 %v639, %v760
    %v798 = vadd.f32 %v640, %v762
    %v799 = vadd.f32 %v641, %v764
    %v800 = vadd.f32 %v642, %v768
    %v801 = vadd.f32 %v643, %v770
    %v802 = vadd.f32 %v644, %v772
    %v803 = vadd.f32 %v645, %v774
    %v804 = vadd.f32 %v646, %v778
    %v805 = vadd.f32 %v647, %v780
    %v806 = vadd.f32 %v648, %v782
    %v807 = vadd.f32 %v649, %v784
    %v808 = vadd.f32 %v650, %v788
    %v809 = vadd.f32 %v651, %v790
    %v810 = vadd.f32 %v652, %v792
    %v811 = vadd.f32 %v653, %v794
    %s812 = scalar_lea.vmem [#allocation7], 192
    %v813 = vld [vmem:[%s812] sm:$0xff]
    %v814 = vld [vmem:[%s812 + $0x8] sm:$0xff]
    %v815 = vld [vmem:[%s812 + $0x10] sm:$0xff]
    %v816 = vld [vmem:[%s812 + $0x18] sm:$0xff]
    %v817 = vld [vmem:[%s812 + $0x20] sm:$0xff]
    %v818 = vld [vmem:[%s812 + $0x28] sm:$0xff]
    %v821 = vunpack.c.l.b16 %v132
    %v822 = vunpack.c.l.b16 %v133
    %v823 = vpack.c.b16 %v822, %v821
    %v830 = vunpack.c.l.b16 %v813
    %v831 = vunpack.c.h.b16 %v813
    %v832 = vunpack.c.l.b16 %v814
    %v833 = vunpack.c.h.b16 %v814
    %v834 = vunpack.c.l.b16 %v815
    %v835 = vunpack.c.h.b16 %v815
    %v836 = vunpack.c.l.b16 %v816
    %v837 = vunpack.c.h.b16 %v816
    %v838 = vunpack.c.l.b16 %v817
    %v839 = vunpack.c.h.b16 %v817
    %v840 = vunpack.c.l.b16 %v818
    %v841 = vunpack.c.h.b16 %v818
    %v842 = vpack.c.b16 %v832, %v830
    %v843 = vpack.c.b16 %v833, %v831
    %v844 = vpack.c.b16 %v836, %v834
    %v845 = vpack.c.b16 %v837, %v835
    %v846 = vpack.c.b16 %v840, %v838
    %v847 = vpack.c.b16 %v841, %v839
    %v855 = vsel %vm305, %v823, 0
    %857 = vmatprep.subr.bf16.mxu0 0
    %858 = vmatpush1.bf16.msra.mxu0 0
    %859 = vmatprep.subr.bf16.mxu0 0
    %860 = vmatpush1.bf16.msra.mxu0 0
    %861 = vmatprep.subr.bf16.mxu0 0
    %862 = vmatpush1.bf16.msra.mxu0 0
    %863 = vmatprep.subr.bf16.mxu0 0
    %864 = vmatpush1.bf16.msra.mxu0 0
    %865 = vmatprep.subr.bf16.mxu0 0
    %866 = vmatpush1.bf16.msra.mxu0 0
    %867 = vmatprep.subr.bf16.mxu0 %v847
    %868 = vmatpush1.bf16.msra.mxu0 %v846
    %869 = vmatprep.subr.bf16.mxu0 %v845
    %870 = vmatpush1.bf16.msra.mxu0 %v844
    %871 = vmatprep.subr.bf16.mxu0 %v843
    %872 = vmatpush1.bf16.msra.mxu0 %v842
    %873 = vmatprep.subr.bf16.mxu0 0
    %874 = vmatpush2.bf16.msra.mxu0 0
    %875 = vmatprep.subr.bf16.mxu0 0
    %876 = vmatpush2.bf16.msra.mxu0 0
    %877 = vmatprep.subr.bf16.mxu0 0
    %878 = vmatpush2.bf16.msra.mxu0 0
    %879 = vmatprep.subr.bf16.mxu0 0
    %880 = vmatpush2.bf16.msra.mxu0 0
    %881 = vmatprep.subr.bf16.mxu0 0
    %882 = vmatpush2.bf16.msra.mxu0 0
    %883 = vmatprep.subr.bf16.mxu0 0
    %884 = vmatpush2.bf16.msra.mxu0 0
    %885 = vmatprep.subr.bf16.mxu0 0
    %886 = vmatpush2.bf16.msra.mxu0 0
    %887 = vmatprep.subr.bf16.mxu0 0
    %888 = vmatpush2.bf16.msra.mxu0 0
    %889 = vmatprep.mubr.bf16.mxu0 0
    %890 = vmatmul.mubr.bf16.gmra.mxu0 %v715
    %v891 = vpop.f32.mrf.mxu0
    %v892 = vadd.f32 0.0, %v891
    %v893 = vpop.f32.mrf.mxu0
    %v894 = vadd.f32 0.0, %v893
    %v895 = vpop.f32.mrf.mxu0
    %v896 = vadd.f32 0.0, %v895
    %v897 = vpop.f32.mrf.mxu0
    %v898 = vadd.f32 0.0, %v897
    %899 = vmatprep.mubr.bf16.mxu0 0
    %900 = vmatmul.mubr.bf16.gmra.mxu0 %v718
    %v901 = vpop.f32.mrf.mxu0
    %v902 = vadd.f32 0.0, %v901
    %v903 = vpop.f32.mrf.mxu0
    %v904 = vadd.f32 0.0, %v903
    %v905 = vpop.f32.mrf.mxu0
    %v906 = vadd.f32 0.0, %v905
    %v907 = vpop.f32.mrf.mxu0
    %v908 = vadd.f32 0.0, %v907
    %909 = vmatprep.mubr.bf16.mxu0 0
    %910 = vmatmul.mubr.bf16.gmra.mxu0 %v721
    %v911 = vpop.f32.mrf.mxu0
    %v912 = vadd.f32 0.0, %v911
    %v913 = vpop.f32.mrf.mxu0
    %v914 = vadd.f32 0.0, %v913
    %v915 = vpop.f32.mrf.mxu0
    %v916 = vadd.f32 0.0, %v915
    %v917 = vpop.f32.mrf.mxu0
    %v918 = vadd.f32 0.0, %v917
    %919 = vmatprep.mubr.bf16.mxu0 0
    %920 = vmatmul.mubr.bf16.gmra.mxu0 %v855
    %v921 = vpop.f32.mrf.mxu0
    %v922 = vadd.f32 0.0, %v921
    %v923 = vpop.f32.mrf.mxu0
    %v924 = vadd.f32 0.0, %v923
    %v925 = vpop.f32.mrf.mxu0
    %v926 = vadd.f32 0.0, %v925
    %v927 = vpop.f32.mrf.mxu0
    %v928 = vadd.f32 0.0, %v927
    %929 = vdwg.mxu0
    %v930 = vadd.f32 %v796, %v892
    %v931 = vadd.f32 %v797, %v894
    %v932 = vadd.f32 %v798, %v896
    %v933 = vadd.f32 %v799, %v898
    %v934 = vadd.f32 %v800, %v902
    %v935 = vadd.f32 %v801, %v904
    %v936 = vadd.f32 %v802, %v906
    %v937 = vadd.f32 %v803, %v908
    %v938 = vadd.f32 %v804, %v912
    %v939 = vadd.f32 %v805, %v914
    %v940 = vadd.f32 %v806, %v916
    %v941 = vadd.f32 %v807, %v918
    %v942 = vadd.f32 %v808, %v922
    %v943 = vadd.f32 %v809, %v924
    %v944 = vadd.f32 %v810, %v926
    %v945 = vadd.f32 %v811, %v928
    %s946 = scalar_lea.vmem [#allocation7], 336
    %v947 = vld [vmem:[%s946] sm:$0xff]
    %v948 = vld [vmem:[%s946 + $0x8] sm:$0xff]
    %v949 = vld [vmem:[%s946 + $0x10] sm:$0xff]
    %v950 = vld [vmem:[%s946 + $0x18] sm:$0xff]
    %v951 = vld [vmem:[%s946 + $0x20] sm:$0xff]
    %v952 = vld [vmem:[%s946 + $0x28] sm:$0xff]
    %v955 = vunpack.c.l.b16 %v135
    %v956 = vunpack.c.l.b16 %v136
    %v957 = vpack.c.b16 %v956, %v955
    %v964 = vunpack.c.l.b16 %v947
    %v965 = vunpack.c.h.b16 %v947
    %v966 = vunpack.c.l.b16 %v948
    %v967 = vunpack.c.h.b16 %v948
    %v968 = vunpack.c.l.b16 %v949
    %v969 = vunpack.c.h.b16 %v949
    %v970 = vunpack.c.l.b16 %v950
    %v971 = vunpack.c.h.b16 %v950
    %v972 = vunpack.c.l.b16 %v951
    %v973 = vunpack.c.h.b16 %v951
    %v974 = vunpack.c.l.b16 %v952
    %v975 = vunpack.c.h.b16 %v952
    %v976 = vpack.c.b16 %v966, %v964
    %v977 = vpack.c.b16 %v967, %v965
    %v978 = vpack.c.b16 %v970, %v968
    %v979 = vpack.c.b16 %v971, %v969
    %v980 = vpack.c.b16 %v974, %v972
    %v981 = vpack.c.b16 %v975, %v973
    %v989 = vsel %vm305, %v957, 0
    %991 = vmatprep.subr.bf16.mxu0 0
    %992 = vmatpush1.bf16.msra.mxu0 0
    %993 = vmatprep.subr.bf16.mxu0 0
    %994 = vmatpush1.bf16.msra.mxu0 0
    %995 = vmatprep.subr.bf16.mxu0 0
    %996 = vmatpush1.bf16.msra.mxu0 0
    %997 = vmatprep.subr.bf16.mxu0 0
    %998 = vmatpush1.bf16.msra.mxu0 0
    %999 = vmatprep.subr.bf16.mxu0 0
    %1000 = vmatpush1.bf16.msra.mxu0 0
    %1001 = vmatprep.subr.bf16.mxu0 %v981
    %1002 = vmatpush1.bf16.msra.mxu0 %v980
    %1003 = vmatprep.subr.bf16.mxu0 %v979
    %1004 = vmatpush1.bf16.msra.mxu0 %v978
    %1005 = vmatprep.subr.bf16.mxu0 %v977
    %1006 = vmatpush1.bf16.msra.mxu0 %v976
    %1007 = vmatprep.subr.bf16.mxu0 0
    %1008 = vmatpush2.bf16.msra.mxu0 0
    %1009 = vmatprep.subr.bf16.mxu0 0
    %1010 = vmatpush2.bf16.msra.mxu0 0
    %1011 = vmatprep.subr.bf16.mxu0 0
    %1012 = vmatpush2.bf16.msra.mxu0 0
    %1013 = vmatprep.subr.bf16.mxu0 0
    %1014 = vmatpush2.bf16.msra.mxu0 0
    %1015 = vmatprep.subr.bf16.mxu0 0
    %1016 = vmatpush2.bf16.msra.mxu0 0
    %1017 = vmatprep.subr.bf16.mxu0 0
    %1018 = vmatpush2.bf16.msra.mxu0 0
    %1019 = vmatprep.subr.bf16.mxu0 0
    %1020 = vmatpush2.bf16.msra.mxu0 0
    %1021 = vmatprep.subr.bf16.mxu0 0
    %1022 = vmatpush2.bf16.msra.mxu0 0
    %1023 = vmatprep.mubr.bf16.mxu0 0
    %1024 = vmatmul.mubr.bf16.gmra.mxu0 %v718
    %v1025 = vpop.f32.mrf.mxu0
    %v1026 = vadd.f32 0.0, %v1025
    %v1027 = vpop.f32.mrf.mxu0
    %v1028 = vadd.f32 0.0, %v1027
    %v1029 = vpop.f32.mrf.mxu0
    %v1030 = vadd.f32 0.0, %v1029
    %v1031 = vpop.f32.mrf.mxu0
    %v1032 = vadd.f32 0.0, %v1031
    %1033 = vmatprep.mubr.bf16.mxu0 0
    %1034 = vmatmul.mubr.bf16.gmra.mxu0 %v721
    %v1035 = vpop.f32.mrf.mxu0
    %v1036 = vadd.f32 0.0, %v1035
    %v1037 = vpop.f32.mrf.mxu0
    %v1038 = vadd.f32 0.0, %v1037
    %v1039 = vpop.f32.mrf.mxu0
    %v1040 = vadd.f32 0.0, %v1039
    %v1041 = vpop.f32.mrf.mxu0
    %v1042 = vadd.f32 0.0, %v1041
    %1043 = vmatprep.mubr.bf16.mxu0 0
    %1044 = vmatmul.mubr.bf16.gmra.mxu0 %v855
    %v1045 = vpop.f32.mrf.mxu0
    %v1046 = vadd.f32 0.0, %v1045
    %v1047 = vpop.f32.mrf.mxu0
    %v1048 = vadd.f32 0.0, %v1047
    %v1049 = vpop.f32.mrf.mxu0
    %v1050 = vadd.f32 0.0, %v1049
    %v1051 = vpop.f32.mrf.mxu0
    %v1052 = vadd.f32 0.0, %v1051
    %1053 = vmatprep.mubr.bf16.mxu0 0
    %1054 = vmatmul.mubr.bf16.gmra.mxu0 %v989
    %v1055 = vpop.f32.mrf.mxu0
    %v1056 = vadd.f32 0.0, %v1055
    %v1057 = vpop.f32.mrf.mxu0
    %v1058 = vadd.f32 0.0, %v1057
    %v1059 = vpop.f32.mrf.mxu0
    %v1060 = vadd.f32 0.0, %v1059
    %v1061 = vpop.f32.mrf.mxu0
    %v1062 = vadd.f32 0.0, %v1061
    %1063 = vdwg.mxu0
    %v1064 = vadd.f32 %v930, %v1026
    %v1065 = vadd.f32 %v931, %v1028
    %v1066 = vadd.f32 %v932, %v1030
    %v1067 = vadd.f32 %v933, %v1032
    %v1068 = vadd.f32 %v934, %v1036
    %v1069 = vadd.f32 %v935, %v1038
    %v1070 = vadd.f32 %v936, %v1040
    %v1071 = vadd.f32 %v937, %v1042
    %v1072 = vadd.f32 %v938, %v1046
    %v1073 = vadd.f32 %v939, %v1048
    %v1074 = vadd.f32 %v940, %v1050
    %v1075 = vadd.f32 %v941, %v1052
    %v1076 = vadd.f32 %v942, %v1056
    %v1077 = vadd.f32 %v943, %v1058
    %v1078 = vadd.f32 %v944, %v1060
    %v1079 = vadd.f32 %v945, %v1062
    %v1080 = vld [vmem:[#allocation2 + $0x4] sm:$0xf]
    %v1081 = vld [vmem:[#allocation2 + $0x8] sm:$0xf]
    %v1082 = vld [vmem:[#allocation2 + $0xc] sm:$0x1]
    %v1083 = vld [vmem:[#allocation2 + $0x14] sm:$0xf]
    %v1084 = vld [vmem:[#allocation2 + $0x18] sm:$0xf]
    %v1085 = vld [vmem:[#allocation2 + $0x1c] sm:$0x1]
    %v1086 = vld [vmem:[#allocation2 + $0x24] sm:$0xf]
    %v1087 = vld [vmem:[#allocation2 + $0x28] sm:$0xf]
    %v1088 = vld [vmem:[#allocation2 + $0x2c] sm:$0x1]
    %v1089 = vld [vmem:[#allocation2 + $0x34] sm:$0xf]
    %v1090 = vld [vmem:[#allocation2 + $0x38] sm:$0xf]
    %v1091 = vld [vmem:[#allocation2 + $0x3c] sm:$0x1]
    %v1092 = vld [vmem:[#allocation2 + $0x44] sm:$0xf]
    %v1093 = vld [vmem:[#allocation2 + $0x48] sm:$0xf]
    %v1094 = vld [vmem:[#allocation2 + $0x4c] sm:$0x1]
    %v1095 = vld [vmem:[#allocation2 + $0x54] sm:$0xf]
    %v1096 = vld [vmem:[#allocation2 + $0x58] sm:$0xf]
    %v1097 = vld [vmem:[#allocation2 + $0x5c] sm:$0x1]
    %vm1098 = vsmask.f32 3328
    %vm1099 = vsmask.f32 7440
    %vm1100 = vmor %vm1098, %vm1099
    %v1102 = vshrl.u32 %v1080, 16
    %v1104 = vrot.slane %v1102, 4
    %v1105 = vshll.u32 %v1080, 16
    %v1107 = vrot.slane %v1105, 5
    %v1108 = vor.u32 %v1104, %v1107
    %v1109 = vrot.slane %v1108, 4
    %v1111 = vshll.u32 %v1081, 16
    %v1113 = vrot.slane %v1111, 5
    %v1114 = vsel %vm1100, %v1109, %v1113
    %v1115 = vshrl.u32 %v1081, 16
    %v1117 = vrot.slane %v1115, 4
    %v1118 = vor.u32 %v1117, %v1113
    %v1119 = vrot.slane %v1118, 4
    %v1121 = vshll.u32 %v1082, 16
    %v1123 = vrot.slane %v1121, 5
    %v1124 = vsel %vm1100, %v1119, %v1123
    %v1126 = vshrl.u32 %v1083, 16
    %v1128 = vrot.slane %v1126, 4
    %v1129 = vshll.u32 %v1083, 16
    %v1131 = vrot.slane %v1129, 5
    %v1132 = vor.u32 %v1128, %v1131
    %v1133 = vrot.slane %v1132, 4
    %v1135 = vshll.u32 %v1084, 16
    %v1137 = vrot.slane %v1135, 5
    %v1138 = vsel %vm1100, %v1133, %v1137
    %v1139 = vshrl.u32 %v1084, 16
    %v1141 = vrot.slane %v1139, 4
    %v1142 = vor.u32 %v1141, %v1137
    %v1143 = vrot.slane %v1142, 4
    %v1145 = vshll.u32 %v1085, 16
    %v1147 = vrot.slane %v1145, 5
    %v1148 = vsel %vm1100, %v1143, %v1147
    %v1150 = vshrl.u32 %v1086, 16
    %v1152 = vrot.slane %v1150, 4
    %v1153 = vshll.u32 %v1086, 16
    %v1155 = vrot.slane %v1153, 5
    %v1156 = vor.u32 %v1152, %v1155
    %v1157 = vrot.slane %v1156, 4
    %v1159 = vshll.u32 %v1087, 16
    %v1161 = vrot.slane %v1159, 5
    %v1162 = vsel %vm1100, %v1157, %v1161
    %v1163 = vshrl.u32 %v1087, 16
    %v1165 = vrot.slane %v1163, 4
    %v1166 = vor.u32 %v1165, %v1161
    %v1167 = vrot.slane %v1166, 4
    %v1169 = vshll.u32 %v1088, 16
    %v1171 = vrot.slane %v1169, 5
    %v1172 = vsel %vm1100, %v1167, %v1171
    %v1174 = vshrl.u32 %v1089, 16
    %v1176 = vrot.slane %v1174, 4
    %v1177 = vshll.u32 %v1089, 16
    %v1179 = vrot.slane %v1177, 5
    %v1180 = vor.u32 %v1176, %v1179
    %v1181 = vrot.slane %v1180, 4
    %v1183 = vshll.u32 %v1090, 16
    %v1185 = vrot.slane %v1183, 5
    %v1186 = vsel %vm1100, %v1181, %v1185
    %v1187 = vshrl.u32 %v1090, 16
    %v1189 = vrot.slane %v1187, 4
    %v1190 = vor.u32 %v1189, %v1185
    %v1191 = vrot.slane %v1190, 4
    %v1193 = vshll.u32 %v1091, 16
    %v1195 = vrot.slane %v1193, 5
    %v1196 = vsel %vm1100, %v1191, %v1195
    %s1197 = scalar_lea.vmem [#allocation7], 96
    %v1198 = vld [vmem:[%s1197] sm:$0xff]
    %v1199 = vld [vmem:[%s1197 + $0x8] sm:$0xff]
    %v1200 = vld [vmem:[%s1197 + $0x10] sm:$0xff]
    %v1201 = vld [vmem:[%s1197 + $0x18] sm:$0xff]
    %v1202 = vld [vmem:[%s1197 + $0x20] sm:$0xff]
    %v1203 = vld [vmem:[%s1197 + $0x28] sm:$0xff]
    %v1204 = vunpack.c.l.b16 %v1114
    %v1205 = vunpack.c.l.b16 %v1124
    %v1206 = vunpack.c.l.b16 %v1138
    %v1207 = vunpack.c.l.b16 %v1148
    %v1208 = vunpack.c.l.b16 %v1162
    %v1209 = vunpack.c.l.b16 %v1172
    %v1210 = vunpack.c.l.b16 %v1186
    %v1211 = vunpack.c.l.b16 %v1196
    %v1212 = vpack.c.b16 %v1205, %v1204
    %v1213 = vpack.c.b16 %v1207, %v1206
    %v1214 = vpack.c.b16 %v1209, %v1208
    %v1215 = vpack.c.b16 %v1211, %v1210
    %v1222 = vunpack.c.l.b16 %v1198
    %v1223 = vunpack.c.h.b16 %v1198
    %v1224 = vunpack.c.l.b16 %v1199
    %v1225 = vunpack.c.h.b16 %v1199
    %v1226 = vunpack.c.l.b16 %v1200
    %v1227 = vunpack.c.h.b16 %v1200
    %v1228 = vunpack.c.l.b16 %v1201
    %v1229 = vunpack.c.h.b16 %v1201
    %v1230 = vunpack.c.l.b16 %v1202
    %v1231 = vunpack.c.h.b16 %v1202
    %v1232 = vunpack.c.l.b16 %v1203
    %v1233 = vunpack.c.h.b16 %v1203
    %v1234 = vpack.c.b16 %v1224, %v1222
    %v1235 = vpack.c.b16 %v1225, %v1223
    %v1236 = vpack.c.b16 %v1228, %v1226
    %v1237 = vpack.c.b16 %v1229, %v1227
    %v1238 = vpack.c.b16 %v1232, %v1230
    %v1239 = vpack.c.b16 %v1233, %v1231
    %v1247 = vsel %vm305, %v1212, 0
    %v1250 = vsel %vm305, %v1213, 0
    %v1253 = vsel %vm305, %v1214, 0
    %v1256 = vsel %vm305, %v1215, 0
    %1258 = vmatprep.subr.bf16.mxu0 0
    %1259 = vmatpush1.bf16.msra.mxu0 0
    %1260 = vmatprep.subr.bf16.mxu0 0
    %1261 = vmatpush1.bf16.msra.mxu0 0
    %1262 = vmatprep.subr.bf16.mxu0 0
    %1263 = vmatpush1.bf16.msra.mxu0 0
    %1264 = vmatprep.subr.bf16.mxu0 0
    %1265 = vmatpush1.bf16.msra.mxu0 0
    %1266 = vmatprep.subr.bf16.mxu0 0
    %1267 = vmatpush1.bf16.msra.mxu0 0
    %1268 = vmatprep.subr.bf16.mxu0 %v1239
    %1269 = vmatpush1.bf16.msra.mxu0 %v1238
    %1270 = vmatprep.subr.bf16.mxu0 %v1237
    %1271 = vmatpush1.bf16.msra.mxu0 %v1236
    %1272 = vmatprep.subr.bf16.mxu0 %v1235
    %1273 = vmatpush1.bf16.msra.mxu0 %v1234
    %1274 = vmatprep.subr.bf16.mxu0 0
    %1275 = vmatpush2.bf16.msra.mxu0 0
    %1276 = vmatprep.subr.bf16.mxu0 0
    %1277 = vmatpush2.bf16.msra.mxu0 0
    %1278 = vmatprep.subr.bf16.mxu0 0
    %1279 = vmatpush2.bf16.msra.mxu0 0
    %1280 = vmatprep.subr.bf16.mxu0 0
    %1281 = vmatpush2.bf16.msra.mxu0 0
    %1282 = vmatprep.subr.bf16.mxu0 0
    %1283 = vmatpush2.bf16.msra.mxu0 0
    %1284 = vmatprep.subr.bf16.mxu0 0
    %1285 = vmatpush2.bf16.msra.mxu0 0
    %1286 = vmatprep.subr.bf16.mxu0 0
    %1287 = vmatpush2.bf16.msra.mxu0 0
    %1288 = vmatprep.subr.bf16.mxu0 0
    %1289 = vmatpush2.bf16.msra.mxu0 0
    %1290 = vmatprep.mubr.bf16.mxu0 0
    %1291 = vmatmul.mubr.bf16.gmra.mxu0 %v1247
    %v1292 = vpop.f32.mrf.mxu0
    %v1293 = vadd.f32 0.0, %v1292
    %v1294 = vpop.f32.mrf.mxu0
    %v1295 = vadd.f32 0.0, %v1294
    %v1296 = vpop.f32.mrf.mxu0
    %v1297 = vadd.f32 0.0, %v1296
    %v1298 = vpop.f32.mrf.mxu0
    %v1299 = vadd.f32 0.0, %v1298
    %1300 = vmatprep.mubr.bf16.mxu0 0
    %1301 = vmatmul.mubr.bf16.gmra.mxu0 %v1250
    %v1302 = vpop.f32.mrf.mxu0
    %v1303 = vadd.f32 0.0, %v1302
    %v1304 = vpop.f32.mrf.mxu0
    %v1305 = vadd.f32 0.0, %v1304
    %v1306 = vpop.f32.mrf.mxu0
    %v1307 = vadd.f32 0.0, %v1306
    %v1308 = vpop.f32.mrf.mxu0
    %v1309 = vadd.f32 0.0, %v1308
    %1310 = vmatprep.mubr.bf16.mxu0 0
    %1311 = vmatmul.mubr.bf16.gmra.mxu0 %v1253
    %v1312 = vpop.f32.mrf.mxu0
    %v1313 = vadd.f32 0.0, %v1312
    %v1314 = vpop.f32.mrf.mxu0
    %v1315 = vadd.f32 0.0, %v1314
    %v1316 = vpop.f32.mrf.mxu0
    %v1317 = vadd.f32 0.0, %v1316
    %v1318 = vpop.f32.mrf.mxu0
    %v1319 = vadd.f32 0.0, %v1318
    %1320 = vmatprep.mubr.bf16.mxu0 0
    %1321 = vmatmul.mubr.bf16.gmra.mxu0 %v1256
    %v1322 = vpop.f32.mrf.mxu0
    %v1323 = vadd.f32 0.0, %v1322
    %v1324 = vpop.f32.mrf.mxu0
    %v1325 = vadd.f32 0.0, %v1324
    %v1326 = vpop.f32.mrf.mxu0
    %v1327 = vadd.f32 0.0, %v1326
    %v1328 = vpop.f32.mrf.mxu0
    %v1329 = vadd.f32 0.0, %v1328
    %1330 = vdwg.mxu0
    %v1331 = vadd.f32 %v1064, %v1293
    %v1332 = vadd.f32 %v1065, %v1295
    %v1333 = vadd.f32 %v1066, %v1297
    %v1334 = vadd.f32 %v1067, %v1299
    %v1335 = vadd.f32 %v1068, %v1303
    %v1336 = vadd.f32 %v1069, %v1305
    %v1337 = vadd.f32 %v1070, %v1307
    %v1338 = vadd.f32 %v1071, %v1309
    %v1339 = vadd.f32 %v1072, %v1313
    %v1340 = vadd.f32 %v1073, %v1315
    %v1341 = vadd.f32 %v1074, %v1317
    %v1342 = vadd.f32 %v1075, %v1319
    %v1343 = vadd.f32 %v1076, %v1323
    %v1344 = vadd.f32 %v1077, %v1325
    %v1345 = vadd.f32 %v1078, %v1327
    %v1346 = vadd.f32 %v1079, %v1329
    %v1348 = vshrl.u32 %v1092, 16
    %v1350 = vrot.slane %v1348, 4
    %v1351 = vshll.u32 %v1092, 16
    %v1353 = vrot.slane %v1351, 5
    %v1354 = vor.u32 %v1350, %v1353
    %v1355 = vrot.slane %v1354, 4
    %v1357 = vshll.u32 %v1093, 16
    %v1359 = vrot.slane %v1357, 5
    %v1360 = vsel %vm1100, %v1355, %v1359
    %v1361 = vshrl.u32 %v1093, 16
    %v1363 = vrot.slane %v1361, 4
    %v1364 = vor.u32 %v1363, %v1359
    %v1365 = vrot.slane %v1364, 4
    %v1367 = vshll.u32 %v1094, 16
    %v1369 = vrot.slane %v1367, 5
    %v1370 = vsel %vm1100, %v1365, %v1369
    %s1371 = scalar_lea.vmem [#allocation7], 240
    %v1372 = vld [vmem:[%s1371] sm:$0xff]
    %v1373 = vld [vmem:[%s1371 + $0x8] sm:$0xff]
    %v1374 = vld [vmem:[%s1371 + $0x10] sm:$0xff]
    %v1375 = vld [vmem:[%s1371 + $0x18] sm:$0xff]
    %v1376 = vld [vmem:[%s1371 + $0x20] sm:$0xff]
    %v1377 = vld [vmem:[%s1371 + $0x28] sm:$0xff]
    %v1378 = vunpack.c.l.b16 %v1360
    %v1379 = vunpack.c.l.b16 %v1370
    %v1380 = vpack.c.b16 %v1379, %v1378
    %v1387 = vunpack.c.l.b16 %v1372
    %v1388 = vunpack.c.h.b16 %v1372
    %v1389 = vunpack.c.l.b16 %v1373
    %v1390 = vunpack.c.h.b16 %v1373
    %v1391 = vunpack.c.l.b16 %v1374
    %v1392 = vunpack.c.h.b16 %v1374
    %v1393 = vunpack.c.l.b16 %v1375
    %v1394 = vunpack.c.h.b16 %v1375
    %v1395 = vunpack.c.l.b16 %v1376
    %v1396 = vunpack.c.h.b16 %v1376
    %v1397 = vunpack.c.l.b16 %v1377
    %v1398 = vunpack.c.h.b16 %v1377
    %v1399 = vpack.c.b16 %v1389, %v1387
    %v1400 = vpack.c.b16 %v1390, %v1388
    %v1401 = vpack.c.b16 %v1393, %v1391
    %v1402 = vpack.c.b16 %v1394, %v1392
    %v1403 = vpack.c.b16 %v1397, %v1395
    %v1404 = vpack.c.b16 %v1398, %v1396
    %v1412 = vsel %vm305, %v1380, 0
    %1414 = vmatprep.subr.bf16.mxu0 0
    %1415 = vmatpush1.bf16.msra.mxu0 0
    %1416 = vmatprep.subr.bf16.mxu0 0
    %1417 = vmatpush1.bf16.msra.mxu0 0
    %1418 = vmatprep.subr.bf16.mxu0 0
    %1419 = vmatpush1.bf16.msra.mxu0 0
    %1420 = vmatprep.subr.bf16.mxu0 0
    %1421 = vmatpush1.bf16.msra.mxu0 0
    %1422 = vmatprep.subr.bf16.mxu0 0
    %1423 = vmatpush1.bf16.msra.mxu0 0
    %1424 = vmatprep.subr.bf16.mxu0 %v1404
    %1425 = vmatpush1.bf16.msra.mxu0 %v1403
    %1426 = vmatprep.subr.bf16.mxu0 %v1402
    %1427 = vmatpush1.bf16.msra.mxu0 %v1401
    %1428 = vmatprep.subr.bf16.mxu0 %v1400
    %1429 = vmatpush1.bf16.msra.mxu0 %v1399
    %1430 = vmatprep.subr.bf16.mxu0 0
    %1431 = vmatpush2.bf16.msra.mxu0 0
    %1432 = vmatprep.subr.bf16.mxu0 0
    %1433 = vmatpush2.bf16.msra.mxu0 0
    %1434 = vmatprep.subr.bf16.mxu0 0
    %1435 = vmatpush2.bf16.msra.mxu0 0
    %1436 = vmatprep.subr.bf16.mxu0 0
    %1437 = vmatpush2.bf16.msra.mxu0 0
    %1438 = vmatprep.subr.bf16.mxu0 0
    %1439 = vmatpush2.bf16.msra.mxu0 0
    %1440 = vmatprep.subr.bf16.mxu0 0
    %1441 = vmatpush2.bf16.msra.mxu0 0
    %1442 = vmatprep.subr.bf16.mxu0 0
    %1443 = vmatpush2.bf16.msra.mxu0 0
    %1444 = vmatprep.subr.bf16.mxu0 0
    %1445 = vmatpush2.bf16.msra.mxu0 0
    %1446 = vmatprep.mubr.bf16.mxu0 0
    %1447 = vmatmul.mubr.bf16.gmra.mxu0 %v1250
    %v1448 = vpop.f32.mrf.mxu0
    %v1449 = vadd.f32 0.0, %v1448
    %v1450 = vpop.f32.mrf.mxu0
    %v1451 = vadd.f32 0.0, %v1450
    %v1452 = vpop.f32.mrf.mxu0
    %v1453 = vadd.f32 0.0, %v1452
    %v1454 = vpop.f32.mrf.mxu0
    %v1455 = vadd.f32 0.0, %v1454
    %1456 = vmatprep.mubr.bf16.mxu0 0
    %1457 = vmatmul.mubr.bf16.gmra.mxu0 %v1253
    %v1458 = vpop.f32.mrf.mxu0
    %v1459 = vadd.f32 0.0, %v1458
    %v1460 = vpop.f32.mrf.mxu0
    %v1461 = vadd.f32 0.0, %v1460
    %v1462 = vpop.f32.mrf.mxu0
    %v1463 = vadd.f32 0.0, %v1462
    %v1464 = vpop.f32.mrf.mxu0
    %v1465 = vadd.f32 0.0, %v1464
    %1466 = vmatprep.mubr.bf16.mxu0 0
    %1467 = vmatmul.mubr.bf16.gmra.mxu0 %v1256
    %v1468 = vpop.f32.mrf.mxu0
    %v1469 = vadd.f32 0.0, %v1468
    %v1470 = vpop.f32.mrf.mxu0
    %v1471 = vadd.f32 0.0, %v1470
    %v1472 = vpop.f32.mrf.mxu0
    %v1473 = vadd.f32 0.0, %v1472
    %v1474 = vpop.f32.mrf.mxu0
    %v1475 = vadd.f32 0.0, %v1474
    %1476 = vmatprep.mubr.bf16.mxu0 0
    %1477 = vmatmul.mubr.bf16.gmra.mxu0 %v1412
    %v1478 = vpop.f32.mrf.mxu0
    %v1479 = vadd.f32 0.0, %v1478
    %v1480 = vpop.f32.mrf.mxu0
    %v1481 = vadd.f32 0.0, %v1480
    %v1482 = vpop.f32.mrf.mxu0
    %v1483 = vadd.f32 0.0, %v1482
    %v1484 = vpop.f32.mrf.mxu0
    %v1485 = vadd.f32 0.0, %v1484
    %1486 = vdwg.mxu0
    %v1487 = vadd.f32 %v1331, %v1449
    %v1488 = vadd.f32 %v1332, %v1451
    %v1489 = vadd.f32 %v1333, %v1453
    %v1490 = vadd.f32 %v1334, %v1455
    %v1491 = vadd.f32 %v1335, %v1459
    %v1492 = vadd.f32 %v1336, %v1461
    %v1493 = vadd.f32 %v1337, %v1463
    %v1494 = vadd.f32 %v1338, %v1465
    %v1495 = vadd.f32 %v1339, %v1469
    %v1496 = vadd.f32 %v1340, %v1471
    %v1497 = vadd.f32 %v1341, %v1473
    %v1498 = vadd.f32 %v1342, %v1475
    %v1499 = vadd.f32 %v1343, %v1479
    %v1500 = vadd.f32 %v1344, %v1481
    %v1501 = vadd.f32 %v1345, %v1483
    %v1502 = vadd.f32 %v1346, %v1485
    %v1504 = vshrl.u32 %v1095, 16
    %v1506 = vrot.slane %v1504, 4
    %v1507 = vshll.u32 %v1095, 16
    %v1509 = vrot.slane %v1507, 5
    %v1510 = vor.u32 %v1506, %v1509
    %v1511 = vrot.slane %v1510, 4
    %v1513 = vshll.u32 %v1096, 16
    %v1515 = vrot.slane %v1513, 5
    %v1516 = vsel %vm1100, %v1511, %v1515
    %v1517 = vshrl.u32 %v1096, 16
    %v1519 = vrot.slane %v1517, 4
    %v1520 = vor.u32 %v1519, %v1515
    %v1521 = vrot.slane %v1520, 4
    %v1523 = vshll.u32 %v1097, 16
    %v1525 = vrot.slane %v1523, 5
    %v1526 = vsel %vm1100, %v1521, %v1525
    %s1527 = scalar_lea.vmem [#allocation7], 384
    %v1528 = vld [vmem:[%s1527] sm:$0xff]
    %v1529 = vld [vmem:[%s1527 + $0x8] sm:$0xff]
    %v1530 = vld [vmem:[%s1527 + $0x10] sm:$0xff]
    %v1531 = vld [vmem:[%s1527 + $0x18] sm:$0xff]
    %v1532 = vld [vmem:[%s1527 + $0x20] sm:$0xff]
    %v1533 = vld [vmem:[%s1527 + $0x28] sm:$0xff]
    %v1534 = vunpack.c.l.b16 %v1516
    %v1535 = vunpack.c.l.b16 %v1526
    %v1536 = vpack.c.b16 %v1535, %v1534
    %v1543 = vunpack.c.l.b16 %v1528
    %v1544 = vunpack.c.h.b16 %v1528
    %v1545 = vunpack.c.l.b16 %v1529
    %v1546 = vunpack.c.h.b16 %v1529
    %v1547 = vunpack.c.l.b16 %v1530
    %v1548 = vunpack.c.h.b16 %v1530
    %v1549 = vunpack.c.l.b16 %v1531
    %v1550 = vunpack.c.h.b16 %v1531
    %v1551 = vunpack.c.l.b16 %v1532
    %v1552 = vunpack.c.h.b16 %v1532
    %v1553 = vunpack.c.l.b16 %v1533
    %v1554 = vunpack.c.h.b16 %v1533
    %v1555 = vpack.c.b16 %v1545, %v1543
    %v1556 = vpack.c.b16 %v1546, %v1544
    %v1557 = vpack.c.b16 %v1549, %v1547
    %v1558 = vpack.c.b16 %v1550, %v1548
    %v1559 = vpack.c.b16 %v1553, %v1551
    %v1560 = vpack.c.b16 %v1554, %v1552
    %v1568 = vsel %vm305, %v1536, 0
    %1570 = vmatprep.subr.bf16.mxu0 0
    %1571 = vmatpush1.bf16.msra.mxu0 0
    %1572 = vmatprep.subr.bf16.mxu0 0
    %1573 = vmatpush1.bf16.msra.mxu0 0
    %1574 = vmatprep.subr.bf16.mxu0 0
    %1575 = vmatpush1.bf16.msra.mxu0 0
    %1576 = vmatprep.subr.bf16.mxu0 0
    %1577 = vmatpush1.bf16.msra.mxu0 0
    %1578 = vmatprep.subr.bf16.mxu0 0
    %1579 = vmatpush1.bf16.msra.mxu0 0
    %1580 = vmatprep.subr.bf16.mxu0 %v1560
    %1581 = vmatpush1.bf16.msra.mxu0 %v1559
    %1582 = vmatprep.subr.bf16.mxu0 %v1558
    %1583 = vmatpush1.bf16.msra.mxu0 %v1557
    %1584 = vmatprep.subr.bf16.mxu0 %v1556
    %1585 = vmatpush1.bf16.msra.mxu0 %v1555
    %1586 = vmatprep.subr.bf16.mxu0 0
    %1587 = vmatpush2.bf16.msra.mxu0 0
    %1588 = vmatprep.subr.bf16.mxu0 0
    %1589 = vmatpush2.bf16.msra.mxu0 0
    %1590 = vmatprep.subr.bf16.mxu0 0
    %1591 = vmatpush2.bf16.msra.mxu0 0
    %1592 = vmatprep.subr.bf16.mxu0 0
    %1593 = vmatpush2.bf16.msra.mxu0 0
    %1594 = vmatprep.subr.bf16.mxu0 0
    %1595 = vmatpush2.bf16.msra.mxu0 0
    %1596 = vmatprep.subr.bf16.mxu0 0
    %1597 = vmatpush2.bf16.msra.mxu0 0
    %1598 = vmatprep.subr.bf16.mxu0 0
    %1599 = vmatpush2.bf16.msra.mxu0 0
    %1600 = vmatprep.subr.bf16.mxu0 0
    %1601 = vmatpush2.bf16.msra.mxu0 0
    %1602 = vmatprep.mubr.bf16.mxu0 0
    %1603 = vmatmul.mubr.bf16.gmra.mxu0 %v1253
    %v1604 = vpop.f32.mrf.mxu0
    %v1605 = vadd.f32 0.0, %v1604
    %v1606 = vpop.f32.mrf.mxu0
    %v1607 = vadd.f32 0.0, %v1606
    %v1608 = vpop.f32.mrf.mxu0
    %v1609 = vadd.f32 0.0, %v1608
    %v1610 = vpop.f32.mrf.mxu0
    %v1611 = vadd.f32 0.0, %v1610
    %1612 = vmatprep.mubr.bf16.mxu0 0
    %1613 = vmatmul.mubr.bf16.gmra.mxu0 %v1256
    %v1614 = vpop.f32.mrf.mxu0
    %v1615 = vadd.f32 0.0, %v1614
    %v1616 = vpop.f32.mrf.mxu0
    %v1617 = vadd.f32 0.0, %v1616
    %v1618 = vpop.f32.mrf.mxu0
    %v1619 = vadd.f32 0.0, %v1618
    %v1620 = vpop.f32.mrf.mxu0
    %v1621 = vadd.f32 0.0, %v1620
    %1622 = vmatprep.mubr.bf16.mxu0 0
    %1623 = vmatmul.mubr.bf16.gmra.mxu0 %v1412
    %v1624 = vpop.f32.mrf.mxu0
    %v1625 = vadd.f32 0.0, %v1624
    %v1626 = vpop.f32.mrf.mxu0
    %v1627 = vadd.f32 0.0, %v1626
    %v1628 = vpop.f32.mrf.mxu0
    %v1629 = vadd.f32 0.0, %v1628
    %v1630 = vpop.f32.mrf.mxu0
    %v1631 = vadd.f32 0.0, %v1630
    %1632 = vmatprep.mubr.bf16.mxu0 0
    %1633 = vmatmul.mubr.bf16.gmra.mxu0 %v1568
    %v1634 = vpop.f32.mrf.mxu0
    %v1635 = vadd.f32 0.0, %v1634
    %v1636 = vpop.f32.mrf.mxu0
    %v1637 = vadd.f32 0.0, %v1636
    %v1638 = vpop.f32.mrf.mxu0
    %v1639 = vadd.f32 0.0, %v1638
    %v1640 = vpop.f32.mrf.mxu0
    %v1641 = vadd.f32 0.0, %v1640
    %1642 = vdwg.mxu0
    %v1643 = vadd.f32 %v1487, %v1605
    %v1644 = vadd.f32 %v1488, %v1607
    %v1645 = vadd.f32 %v1489, %v1609
    %v1646 = vadd.f32 %v1490, %v1611
    %v1647 = vadd.f32 %v1491, %v1615
    %v1648 = vadd.f32 %v1492, %v1617
    %v1649 = vadd.f32 %v1493, %v1619
    %v1650 = vadd.f32 %v1494, %v1621
    %v1651 = vadd.f32 %v1495, %v1625
    %v1652 = vadd.f32 %v1496, %v1627
    %v1653 = vadd.f32 %v1497, %v1629
    %v1654 = vadd.f32 %v1498, %v1631
    %v1655 = vadd.f32 %v1499, %v1635
    %v1656 = vadd.f32 %v1500, %v1637
    %v1657 = vadd.f32 %v1501, %v1639
    %v1658 = vadd.f32 %v1502, %v1641
    %v1659 = vld [vmem:[%s3] sm:$0x3]
    %v1661 = vlaneseq
    %v1662 = vshrl.u32 %v1661, 7
    %v1663 = vsub.s32 0, %v1662
    %v1664 = vrot.slane %v1659, %v1663
    %v1665 = vlaneseq
    %v1666 = vshrl.u32 %v1665, 7
    %v1667 = vsub.s32 1, %v1666
    %v1668 = vrot.slane %v1659, %v1667
    %v1671 = vadd.f32 %v1643, %v1664
    %v1672 = vadd.f32 %v1644, %v1668
    %v1673 = vadd.f32 %v1645, %v1664
    %v1674 = vadd.f32 %v1646, %v1668
    %v1675 = vadd.f32 %v1647, %v1664
    %v1676 = vadd.f32 %v1648, %v1668
    %v1677 = vadd.f32 %v1649, %v1664
    %v1678 = vadd.f32 %v1650, %v1668
    %v1679 = vadd.f32 %v1651, %v1664
    %v1680 = vadd.f32 %v1652, %v1668
    %v1681 = vadd.f32 %v1653, %v1664
    %v1682 = vadd.f32 %v1654, %v1668
    %v1683 = vadd.f32 %v1655, %v1664
    %v1684 = vadd.f32 %v1656, %v1668
    %v1685 = vadd.f32 %v1657, %v1664
    %v1686 = vadd.f32 %v1658, %v1668
    %s1687 = sld [smem:[#allocation3]]
    %vm1688 = vcmp.ge.f32.partialorder %v1671, 0.0
    %vm1689 = vcmp.ge.f32.partialorder %v1672, 0.0
    %vm1690 = vcmp.ge.f32.partialorder %v1673, 0.0
    %vm1691 = vcmp.ge.f32.partialorder %v1674, 0.0
    %vm1692 = vcmp.ge.f32.partialorder %v1675, 0.0
    %vm1693 = vcmp.ge.f32.partialorder %v1676, 0.0
    %vm1694 = vcmp.ge.f32.partialorder %v1677, 0.0
    %vm1695 = vcmp.ge.f32.partialorder %v1678, 0.0
    %vm1696 = vcmp.ge.f32.partialorder %v1679, 0.0
    %vm1697 = vcmp.ge.f32.partialorder %v1680, 0.0
    %vm1698 = vcmp.ge.f32.partialorder %v1681, 0.0
    %vm1699 = vcmp.ge.f32.partialorder %v1682, 0.0
    %vm1700 = vcmp.ge.f32.partialorder %v1683, 0.0
    %vm1701 = vcmp.ge.f32.partialorder %v1684, 0.0
    %vm1702 = vcmp.ge.f32.partialorder %v1685, 0.0
    %vm1703 = vcmp.ge.f32.partialorder %v1686, 0.0
    %v1704 = vstv %s1687
    %v1705 = vmul.f32 %v1704, %v1671
    %v1706 = vmul.f32 %v1704, %v1672
    %v1707 = vmul.f32 %v1704, %v1673
    %v1708 = vmul.f32 %v1704, %v1674
    %v1709 = vmul.f32 %v1704, %v1675
    %v1710 = vmul.f32 %v1704, %v1676
    %v1711 = vmul.f32 %v1704, %v1677
    %v1712 = vmul.f32 %v1704, %v1678
    %v1713 = vmul.f32 %v1704, %v1679
    %v1714 = vmul.f32 %v1704, %v1680
    %v1715 = vmul.f32 %v1704, %v1681
    %v1716 = vmul.f32 %v1704, %v1682
    %v1717 = vmul.f32 %v1704, %v1683
    %v1718 = vmul.f32 %v1704, %v1684
    %v1719 = vmul.f32 %v1704, %v1685
    %v1720 = vmul.f32 %v1704, %v1686
    %v1721 = vsel %vm1688, %v1671, %v1705
    %v1722 = vsel %vm1689, %v1672, %v1706
    %v1723 = vsel %vm1690, %v1673, %v1707
    %v1724 = vsel %vm1691, %v1674, %v1708
    %v1725 = vsel %vm1692, %v1675, %v1709
    %v1726 = vsel %vm1693, %v1676, %v1710
    %v1727 = vsel %vm1694, %v1677, %v1711
    %v1728 = vsel %vm1695, %v1678, %v1712
    %v1729 = vsel %vm1696, %v1679, %v1713
    %v1730 = vsel %vm1697, %v1680, %v1714
    %v1731 = vsel %vm1698, %v1681, %v1715
    %v1732 = vsel %vm1699, %v1682, %v1716
    %v1733 = vsel %vm1700, %v1683, %v1717
    %v1734 = vsel %vm1701, %v1684, %v1718
    %v1735 = vsel %vm1702, %v1685, %v1719
    %v1736 = vsel %vm1703, %v1686, %v1720
    %1737 = vst [vmem:[#allocation9] sm:$0xff] %v1721
    %1738 = vst [vmem:[#allocation9 + $0x8] sm:$0xff] %v1722
    %1739 = vst [vmem:[#allocation9 + $0x10] sm:$0xff] %v1723
    %1740 = vst [vmem:[#allocation9 + $0x18] sm:$0xff] %v1724
    %1741 = vst [vmem:[#allocation9 + $0x20] sm:$0xff] %v1725
    %1742 = vst [vmem:[#allocation9 + $0x28] sm:$0xff] %v1726
    %1743 = vst [vmem:[#allocation9 + $0x30] sm:$0xff] %v1727
    %1744 = vst [vmem:[#allocation9 + $0x38] sm:$0xff] %v1728
    %1745 = vst [vmem:[#allocation9 + $0x40] sm:$0xff] %v1729
    %1746 = vst [vmem:[#allocation9 + $0x48] sm:$0xff] %v1730
    %1747 = vst [vmem:[#allocation9 + $0x50] sm:$0xff] %v1731
    %1748 = vst [vmem:[#allocation9 + $0x58] sm:$0xff] %v1732
    %1749 = vst [vmem:[#allocation9 + $0x60] sm:$0xff] %v1733
    %1750 = vst [vmem:[#allocation9 + $0x68] sm:$0xff] %v1734
    %1751 = vst [vmem:[#allocation9 + $0x70] sm:$0xff] %v1735
    %1752 = vst [vmem:[#allocation9 + $0x78] sm:$0xff] %v1736
    // Predicated region
    $region26: #{tpu_custom_call.1} parent=1 // pred_check
      _
    $region27: #{tpu_custom_call.1} parent=1 // pred_check_branch
      %1754 = sbr.rel (0) target = $region29
    $region28: #{tpu_custom_call.1} parent=1 // pred_region
      %s1756 = ssub.s32 2048, 2048
      %1757 = vsyncadd [#allocation6], %s1756
      %s1758 = sshll.u32 [#allocation9], 4
      %s1759 = int_to_ptr.vmem [resolvable:$true] %s1758
      %1764 = dma.vmem_to_hbm [thread:$0]  %s1759, 2048, %s4, [#allocation6], 256, 256, 16
    $region29: #{tpu_custom_call.1} parent=1 // pred_fallthru
      _
    // Predicated region
    $region30: #{tpu_custom_call.1} parent=1 // pred_check
      _
    $region31: #{tpu_custom_call.1} parent=1 // pred_check_branch
      %1766 = sbr.rel (0) target = $region33
    $region32: #{tpu_custom_call.1} parent=1 // pred_region
      %1767 = dma.done [#allocation6], 2048
    $region33: #{tpu_custom_call.1} parent=1 // pred_fallthru
      _
    %1768 = vsyncpa [#allocation5], 1
    %1769 = vsyncpa [#allocation8], 1
    %1770 = vsyncpa [#allocation6], 1

</llo_original>
